<compile_context>
chip_gen: v7x
topology: tpu7x:2x2x1
jax: 0.10.0
libtpu: 0.0.40
codegen_flags: <defaults>
</compile_context>

<pallas_src>
import numpy as np
import jax
import jax.numpy as jnp
from jax.experimental import pallas as pl
from jax.experimental.pallas import tpu as pltpu

# ---------------- hyperparameters ("trial" choices) ----------------
IN_FEATS = 38
GRAPH_HIDDEN = 64
DEPTH = 2                 # -> exactly one extra GCN layer (gcn2 list has depth-1 entries)
MLP_LAYERS = [150, 30]
OUT_CLASSES = 67
DROPOUT_P = 0.0           # identity (valid trial value); no stochasticity in the kernel
EPS = 1e-5


# ---------------- Pallas kernel ----------------
def _forward_kernel(
    adj_ref, feat_ref, mem_ref,          # per-chunk graph data (bf16)
    w_g1_ref, w_g2_ref, w_aw_ref,        # GCN weights (bf16) + atom-weighting row (f32)
    w_f1_ref, w_l1_ref, w_f2_ref,        # MLP weights (bf16)
    vec_g_ref, vec_f1_ref, vec_l1_ref,   # packed BN scale / bias-folded shift rows (f32)
    tail_ref,                            # [1, 68] f32: fc2 bias (67) ++ atom-weighting bias (1)
    x_ref, aw_ref,                       # outputs
):
    f32 = jnp.float32
    bf16 = jnp.bfloat16

    adj = adj_ref[0]      # [N, N]  D^{-1/2} A D^{-1/2}
    h0 = feat_ref[0]      # [N, 38]
    mem = mem_ref[0]      # [B, N]  graph-membership matrix

    vec_g = vec_g_ref[...]      # [4, 64]
    vec_f1 = vec_f1_ref[...]    # [2, 150]
    vec_l1 = vec_l1_ref[...]    # [2, 30]
    tail = tail_ref[...]        # [1, 68]

    # --- GCN layer 1: aggregate first (in_feats < out_feats), then transform ---
    agg = jnp.dot(adj, h0, preferred_element_type=f32)                         # [N, 38]
    h = jnp.dot(agg.astype(bf16), w_g1_ref[...], preferred_element_type=f32)   # [N, 64]
    h = h * vec_g[0:1, :] + vec_g[1:2, :]     # BN(running stats) with folded GraphConv bias
    h = jnp.maximum(h, 0.0)                   # dropout(p=0) -> identity, then ReLU

    # --- GCN layer 2 (depth - 1 == 1) ---
    agg = jnp.dot(adj, h.astype(bf16), preferred_element_type=f32)             # [N, 64]
    h = jnp.dot(agg.astype(bf16), w_g2_ref[...], preferred_element_type=f32)   # [N, 64]
    h = h * vec_g[2:3, :] + vec_g[3:4, :]
    h = jnp.maximum(h, 0.0)

    # --- WeightAndSum readout: 1-wide projection on VPU/XLU (keep MXU free) ---
    b_aw = tail[:, OUT_CLASSES:OUT_CLASSES + 1]                                # [1, 1]
    aw = jnp.sum(h * w_aw_ref[...], axis=-1, keepdims=True) + b_aw             # [N, 1]
    aw_ref[0] = aw
    wgt = jax.nn.sigmoid(aw)
    hg = jnp.dot(mem, (h * wgt).astype(bf16), preferred_element_type=f32)      # [B, 64]

    # --- MLP head: fc1 -> bn1 -> (dropout) -> relu ---
    x = jnp.dot(hg.astype(bf16), w_f1_ref[...], preferred_element_type=f32)
    x = x * vec_f1[0:1, :] + vec_f1[1:2, :]
    x = jnp.maximum(x, 0.0)

    # --- linears[0] -> bns[0] -> (dropout) -> relu ---
    x = jnp.dot(x.astype(bf16), w_l1_ref[...], preferred_element_type=f32)
    x = x * vec_l1[0:1, :] + vec_l1[1:2, :]
    x = jnp.maximum(x, 0.0)

    # --- fc2 -> sigmoid ---
    x = jnp.dot(x.astype(bf16), w_f2_ref[...], preferred_element_type=f32) + tail[:, :OUT_CLASSES]
    x_ref[0] = jax.nn.sigmoid(x)


def classifier_forward(adj, feats, member, kp):
    """adj: [G,N,N], feats: [G,N,38], member: [G,B,N] (all bf16).
    G batched-graph "chunks" per call; one grid step per chunk, weights pinned in VMEM."""
    G, N, _ = adj.shape
    B = member.shape[1]

    def chunk(shape):
        return pl.BlockSpec((1,) + shape, lambda g: (g, 0, 0))

    def pinned(arr):
        return pl.BlockSpec(arr.shape, lambda g: (0, 0))

    in_specs = [
        chunk((N, N)), chunk((N, IN_FEATS)), chunk((B, N)),
        pinned(kp["w_g1"]), pinned(kp["w_g2"]), pinned(kp["w_aw"]),
        pinned(kp["w_f1"]), pinned(kp["w_l1"]), pinned(kp["w_f2"]),
        pinned(kp["vec_g"]), pinned(kp["vec_f1"]), pinned(kp["vec_l1"]),
        pinned(kp["tail"]),
    ]
    out_specs = (
        pl.BlockSpec((1, B, OUT_CLASSES), lambda g: (g, 0, 0)),
        pl.BlockSpec((1, N, 1), lambda g: (g, 0, 0)),
    )
    out_shape = (
        jax.ShapeDtypeStruct((G, B, OUT_CLASSES), jnp.float32),   # class probabilities
        jax.ShapeDtypeStruct((G, N, 1), jnp.float32),             # atom weights (pre-sigmoid)
    )
    return pl.pallas_call(
        _forward_kernel,
        grid=(G,),
        in_specs=in_specs,
        out_specs=out_specs,
        out_shape=out_shape,
        compiler_params=pltpu.CompilerParams(
            dimension_semantics=("parallel",),      # shards chunks across v7x's 2 TCs
            vmem_limit_bytes=32 * 1024 * 1024,
        ),
    )(adj, feats, member,
      kp["w_g1"], kp["w_g2"], kp["w_aw"],
      kp["w_f1"], kp["w_l1"], kp["w_f2"],
      kp["vec_g"], kp["vec_f1"], kp["vec_l1"], kp["tail"])


# ---------------- deterministic parameter / graph setup (glue) ----------------
def _linear(key, din, dout):
    k1, k2 = jax.random.split(key)
    bound = 1.0 / np.sqrt(din)
    w = jax.random.uniform(k1, (din, dout), minval=-bound, maxval=bound, dtype=jnp.float32)
    b = jax.random.uniform(k2, (dout,), minval=-bound, maxval=bound, dtype=jnp.float32)
    return w, b


def _bn_fold(key, dim):
    """Fold BatchNorm1d (eval mode, running stats) into per-feature scale/shift."""
    k1, k2, k3, k4 = jax.random.split(key, 4)
    gamma = 1.0 + 0.1 * jax.random.normal(k1, (dim,), dtype=jnp.float32)
    beta = 0.1 * jax.random.normal(k2, (dim,), dtype=jnp.float32)
    rmean = 0.05 * jax.random.normal(k3, (dim,), dtype=jnp.float32)
    rvar = 1.0 + 0.1 * jax.random.uniform(k4, (dim,), dtype=jnp.float32)
    scale = gamma / jnp.sqrt(rvar + EPS)
    shift = beta - rmean * scale
    return scale, shift


def make_params(key):
    ks = jax.random.split(key, 10)
    r = {}
    r["w_g1"], r["b_g1"] = _linear(ks[0], IN_FEATS, GRAPH_HIDDEN)
    r["s_g1"], r["t_g1"] = _bn_fold(ks[1], GRAPH_HIDDEN)
    r["w_g2"], r["b_g2"] = _linear(ks[2], GRAPH_HIDDEN, GRAPH_HIDDEN)
    r["s_g2"], r["t_g2"] = _bn_fold(ks[3], GRAPH_HIDDEN)
    r["w_aw"], r["b_aw"] = _linear(ks[4], GRAPH_HIDDEN, 1)
    r["w_f1"], r["b_f1"] = _linear(ks[5], GRAPH_HIDDEN, MLP_LAYERS[0])
    r["s_f1"], r["t_f1"] = _bn_fold(ks[6], MLP_LAYERS[0])
    r["w_l1"], r["b_l1"] = _linear(ks[7], MLP_LAYERS[0], MLP_LAYERS[1])
    r["s_l1"], r["t_l1"] = _bn_fold(ks[8], MLP_LAYERS[1])
    r["w_f2"], r["b_f2"] = _linear(ks[9], MLP_LAYERS[1], OUT_CLASSES)

    bf16 = jnp.bfloat16
    kp = {
        # MXU operands in bf16 (f32 accumulation via preferred_element_type in the kernel)
        "w_g1": r["w_g1"].astype(bf16),
        "w_g2": r["w_g2"].astype(bf16),
        "w_f1": r["w_f1"].astype(bf16),
        "w_l1": r["w_l1"].astype(bf16),
        "w_f2": r["w_f2"].astype(bf16),
        "w_aw": r["w_aw"].reshape(1, GRAPH_HIDDEN),   # f32, used on the VPU
        # Linear/GraphConv biases folded into the BN shift: t' = b*s + t
        "vec_g": jnp.stack([r["s_g1"], r["b_g1"] * r["s_g1"] + r["t_g1"],
                            r["s_g2"], r["b_g2"] * r["s_g2"] + r["t_g2"]]),
        "vec_f1": jnp.stack([r["s_f1"], r["b_f1"] * r["s_f1"] + r["t_f1"]]),
        "vec_l1": jnp.stack([r["s_l1"], r["b_l1"] * r["s_l1"] + r["t_l1"]]),
        "tail": jnp.concatenate([r["b_f2"], r["b_aw"]]).reshape(1, OUT_CLASSES + 1),
    }
    return kp, r


def build_graphs(n_per_graph=8, n_graphs=2, n_chunks=3):
    """n_chunks batched graphs; each chunk is n_graphs ring graphs (odd chunks get a chord).
    Returns stacked normalized adjacency [G,N,N] and membership matrix [G,B,N] (f32)."""
    N = n_per_graph * n_graphs
    adjs, mems = [], []
    for c in range(n_chunks):
        A = np.zeros((N, N), np.float32)
        for g in range(n_graphs):
            off = g * n_per_graph
            for i in range(n_per_graph):
                j = (i + 1) % n_per_graph
                A[off + i, off + j] = 1.0
                A[off + j, off + i] = 1.0
            if c % 2 == 1:
                a, b = off, off + n_per_graph // 2
                A[a, b] = 1.0
                A[b, a] = 1.0
        deg = np.clip(A.sum(axis=1), 1.0, None)          # DGL clamps degree to >= 1
        dinv = 1.0 / np.sqrt(deg)
        adjs.append((A * dinv[None, :]) * dinv[:, None])  # D^{-1/2} A D^{-1/2}
        M = np.zeros((n_graphs, N), np.float32)
        for g in range(n_graphs):
            M[g, g * n_per_graph:(g + 1) * n_per_graph] = 1.0
        mems.append(M)
    return jnp.asarray(np.stack(adjs)), jnp.asarray(np.stack(mems))


# ---------------- pure-JAX f32 reference (same math, un-folded) ----------------
def reference_forward(adj, feats, member, r):
    def one(a, h0, m):
        h = a @ (h0 @ r["w_g1"]) + r["b_g1"]
        h = jnp.maximum(h * r["s_g1"] + r["t_g1"], 0.0)
        h = a @ (h @ r["w_g2"]) + r["b_g2"]
        h = jnp.maximum(h * r["s_g2"] + r["t_g2"], 0.0)
        aw = h @ r["w_aw"] + r["b_aw"]
        hg = m @ (h * jax.nn.sigmoid(aw))
        x = hg @ r["w_f1"] + r["b_f1"]
        x = jnp.maximum(x * r["s_f1"] + r["t_f1"], 0.0)
        x = x @ r["w_l1"] + r["b_l1"]
        x = jnp.maximum(x * r["s_l1"] + r["t_l1"], 0.0)
        x = x @ r["w_f2"] + r["b_f2"]
        return jax.nn.sigmoid(x), aw
    return jax.vmap(one)(adj, feats, member)


if __name__ == "__main__":
    key = jax.random.PRNGKey(0)
    k_feat, k_param = jax.random.split(key)

    n_per_graph, n_graphs, n_chunks = 8, 2, 3
    N = n_per_graph * n_graphs
    adj_f32, member_f32 = build_graphs(n_per_graph, n_graphs, n_chunks)
    feats_f32 = jax.random.normal(k_feat, (n_chunks, N, IN_FEATS), dtype=jnp.float32)
    kp, ref_params = make_params(k_param)

    bf16 = jnp.bfloat16
    probs, atom_weights = classifier_forward(
        adj_f32.astype(bf16), feats_f32.astype(bf16), member_f32.astype(bf16), kp)
    jax.block_until_ready((probs, atom_weights))

    assert probs.shape == (n_chunks, n_graphs, OUT_CLASSES)
    assert atom_weights.shape == (n_chunks, N, 1)
    assert bool(jnp.all(jnp.isfinite(probs))) and bool(jnp.all(jnp.isfinite(atom_weights)))

    ref_probs, ref_aw = reference_forward(adj_f32, feats_f32, member_f32, ref_params)
    np.testing.assert_allclose(np.asarray(probs), np.asarray(ref_probs), atol=5e-2, rtol=5e-2)
    np.testing.assert_allclose(np.asarray(atom_weights), np.asarray(ref_aw), atol=5e-2, rtol=5e-2)

    print("KERNEL_OK")
</pallas_src>

<mosaic_0001>
module attributes {stable_mosaic.version = 11 : i64} {
  func.func @_forward_kernel(%arg0: i32, %arg1: memref<1x16x16xbf16, #tpu.memory_space<vmem>>, %arg2: memref<1x16x38xbf16, #tpu.memory_space<vmem>>, %arg3: memref<1x2x16xbf16, #tpu.memory_space<vmem>>, %arg4: memref<38x64xbf16, #tpu.memory_space<vmem>>, %arg5: memref<64x64xbf16, #tpu.memory_space<vmem>>, %arg6: memref<1x64xf32, #tpu.memory_space<vmem>>, %arg7: memref<64x150xbf16, #tpu.memory_space<vmem>>, %arg8: memref<150x30xbf16, #tpu.memory_space<vmem>>, %arg9: memref<30x67xbf16, #tpu.memory_space<vmem>>, %arg10: memref<4x64xf32, #tpu.memory_space<vmem>>, %arg11: memref<2x150xf32, #tpu.memory_space<vmem>>, %arg12: memref<2x30xf32, #tpu.memory_space<vmem>>, %arg13: memref<1x68xf32, #tpu.memory_space<vmem>>, %arg14: memref<1x2x67xf32, #tpu.memory_space<vmem>>, %arg15: memref<1x16x1xf32, #tpu.memory_space<vmem>>) attributes {dimension_semantics = [#tpu.dimension_semantics<parallel>], iteration_bounds = array<i64: 3>, scalar_prefetch = 0 : i64, scratch_operands = 0 : i64, tpu.core_type = #tpu.core_type<tc>, window_params = [{transform_indices = @transform_0, window_bounds = array<i64: 1, 16, 16>}, {transform_indices = @transform_1, window_bounds = array<i64: 1, 16, 38>}, {transform_indices = @transform_2, window_bounds = array<i64: 1, 2, 16>}, {pipeline_mode = #tpu.pipeline_mode<synchronous>, transform_indices = @transform_3, window_bounds = array<i64: 38, 64>}, {pipeline_mode = #tpu.pipeline_mode<synchronous>, transform_indices = @transform_4, window_bounds = array<i64: 64, 64>}, {pipeline_mode = #tpu.pipeline_mode<synchronous>, transform_indices = @transform_5, window_bounds = array<i64: 1, 64>}, {pipeline_mode = #tpu.pipeline_mode<synchronous>, transform_indices = @transform_6, window_bounds = array<i64: 64, 150>}, {pipeline_mode = #tpu.pipeline_mode<synchronous>, transform_indices = @transform_7, window_bounds = array<i64: 150, 30>}, {pipeline_mode = #tpu.pipeline_mode<synchronous>, transform_indices = @transform_8, window_bounds = array<i64: 30, 67>}, {pipeline_mode = #tpu.pipeline_mode<synchronous>, transform_indices = @transform_9, window_bounds = array<i64: 4, 64>}, {pipeline_mode = #tpu.pipeline_mode<synchronous>, transform_indices = @transform_10, window_bounds = array<i64: 2, 150>}, {pipeline_mode = #tpu.pipeline_mode<synchronous>, transform_indices = @transform_11, window_bounds = array<i64: 2, 30>}, {pipeline_mode = #tpu.pipeline_mode<synchronous>, transform_indices = @transform_12, window_bounds = array<i64: 1, 68>}, {transform_indices = @transform_13, window_bounds = array<i64: 1, 2, 67>}, {transform_indices = @transform_14, window_bounds = array<i64: 1, 16, 1>}]} {
    %c0 = arith.constant 0 : index
    %c0_0 = arith.constant 0 : index
    %c0_1 = arith.constant 0 : index
    %0 = vector.load %arg1[%c0, %c0_0, %c0_1] : memref<1x16x16xbf16, #tpu.memory_space<vmem>>, vector<1x16x16xbf16>
    %1 = vector.shape_cast %0 : vector<1x16x16xbf16> to vector<16x16xbf16>
    %c0_2 = arith.constant 0 : index
    %c0_3 = arith.constant 0 : index
    %c0_4 = arith.constant 0 : index
    %2 = vector.load %arg2[%c0_2, %c0_3, %c0_4] : memref<1x16x38xbf16, #tpu.memory_space<vmem>>, vector<1x16x38xbf16>
    %3 = vector.shape_cast %2 : vector<1x16x38xbf16> to vector<16x38xbf16>
    %c0_5 = arith.constant 0 : index
    %c0_6 = arith.constant 0 : index
    %c0_7 = arith.constant 0 : index
    %4 = vector.load %arg3[%c0_5, %c0_6, %c0_7] : memref<1x2x16xbf16, #tpu.memory_space<vmem>>, vector<1x2x16xbf16>
    %5 = vector.shape_cast %4 : vector<1x2x16xbf16> to vector<2x16xbf16>
    %c0_8 = arith.constant 0 : index
    %c0_9 = arith.constant 0 : index
    %6 = vector.load %arg10[%c0_8, %c0_9] : memref<4x64xf32, #tpu.memory_space<vmem>>, vector<4x64xf32>
    %c0_10 = arith.constant 0 : index
    %c0_11 = arith.constant 0 : index
    %7 = vector.load %arg11[%c0_10, %c0_11] : memref<2x150xf32, #tpu.memory_space<vmem>>, vector<2x150xf32>
    %c0_12 = arith.constant 0 : index
    %c0_13 = arith.constant 0 : index
    %8 = vector.load %arg12[%c0_12, %c0_13] : memref<2x30xf32, #tpu.memory_space<vmem>>, vector<2x30xf32>
    %c0_14 = arith.constant 0 : index
    %c0_15 = arith.constant 0 : index
    %9 = vector.load %arg13[%c0_14, %c0_15] : memref<1x68xf32, #tpu.memory_space<vmem>>, vector<1x68xf32>
    %cst = arith.constant dense<0.000000e+00> : vector<16x38xf32>
    %10 = tpu.matmul %1, %3, %cst {dimension_numbers = #tpu.dot_dimension_numbers<[1], [0], [0], [1], [0, 0, 1, 1], [], []>} : vector<16x16xbf16>, vector<16x38xbf16>, vector<16x38xf32> -> vector<16x38xf32>
    %11 = arith.truncf %10 : vector<16x38xf32> to vector<16x38xbf16>
    %c0_16 = arith.constant 0 : index
    %c0_17 = arith.constant 0 : index
    %12 = vector.load %arg4[%c0_16, %c0_17] : memref<38x64xbf16, #tpu.memory_space<vmem>>, vector<38x64xbf16>
    %cst_18 = arith.constant dense<0.000000e+00> : vector<16x64xf32>
    %13 = tpu.matmul %11, %12, %cst_18 {dimension_numbers = #tpu.dot_dimension_numbers<[1], [0], [0], [1], [0, 0, 1, 1], [], []>} : vector<16x38xbf16>, vector<38x64xbf16>, vector<16x64xf32> -> vector<16x64xf32>
    %14 = vector.extract_strided_slice %6 {offsets = [0, 0], sizes = [1, 64], strides = [1, 1]} : vector<4x64xf32> to vector<1x64xf32>
    %15 = vector.broadcast %14 : vector<1x64xf32> to vector<16x64xf32>
    %16 = arith.mulf %13, %15 : vector<16x64xf32>
    %17 = vector.extract_strided_slice %6 {offsets = [1, 0], sizes = [1, 64], strides = [1, 1]} : vector<4x64xf32> to vector<1x64xf32>
    %18 = vector.broadcast %17 : vector<1x64xf32> to vector<16x64xf32>
    %19 = arith.addf %16, %18 : vector<16x64xf32>
    %cst_19 = arith.constant 0.000000e+00 : f32
    %20 = vector.broadcast %cst_19 : f32 to vector<16x64xf32>
    %21 = arith.maximumf %19, %20 : vector<16x64xf32>
    %22 = arith.truncf %21 : vector<16x64xf32> to vector<16x64xbf16>
    %cst_20 = arith.constant dense<0.000000e+00> : vector<16x64xf32>
    %23 = tpu.matmul %1, %22, %cst_20 {dimension_numbers = #tpu.dot_dimension_numbers<[1], [0], [0], [1], [0, 0, 1, 1], [], []>} : vector<16x16xbf16>, vector<16x64xbf16>, vector<16x64xf32> -> vector<16x64xf32>
    %24 = arith.truncf %23 : vector<16x64xf32> to vector<16x64xbf16>
    %c0_21 = arith.constant 0 : index
    %c0_22 = arith.constant 0 : index
    %25 = vector.load %arg5[%c0_21, %c0_22] : memref<64x64xbf16, #tpu.memory_space<vmem>>, vector<64x64xbf16>
    %cst_23 = arith.constant dense<0.000000e+00> : vector<16x64xf32>
    %26 = tpu.matmul %24, %25, %cst_23 {dimension_numbers = #tpu.dot_dimension_numbers<[1], [0], [0], [1], [0, 0, 1, 1], [], []>} : vector<16x64xbf16>, vector<64x64xbf16>, vector<16x64xf32> -> vector<16x64xf32>
    %27 = vector.extract_strided_slice %6 {offsets = [2, 0], sizes = [1, 64], strides = [1, 1]} : vector<4x64xf32> to vector<1x64xf32>
    %28 = vector.broadcast %27 : vector<1x64xf32> to vector<16x64xf32>
    %29 = arith.mulf %26, %28 : vector<16x64xf32>
    %30 = vector.extract_strided_slice %6 {offsets = [3, 0], sizes = [1, 64], strides = [1, 1]} : vector<4x64xf32> to vector<1x64xf32>
    %31 = vector.broadcast %30 : vector<1x64xf32> to vector<16x64xf32>
    %32 = arith.addf %29, %31 : vector<16x64xf32>
    %cst_24 = arith.constant 0.000000e+00 : f32
    %33 = vector.broadcast %cst_24 : f32 to vector<16x64xf32>
    %34 = arith.maximumf %32, %33 : vector<16x64xf32>
    %35 = vector.extract_strided_slice %9 {offsets = [0, 67], sizes = [1, 1], strides = [1, 1]} : vector<1x68xf32> to vector<1x1xf32>
    %c0_25 = arith.constant 0 : index
    %c0_26 = arith.constant 0 : index
    %36 = vector.load %arg6[%c0_25, %c0_26] : memref<1x64xf32, #tpu.memory_space<vmem>>, vector<1x64xf32>
    %37 = vector.broadcast %36 : vector<1x64xf32> to vector<16x64xf32>
    %38 = arith.mulf %34, %37 : vector<16x64xf32>
    %cst_27 = arith.constant dense<0.000000e+00> : vector<16xf32>
    %39 = vector.multi_reduction <add>, %38, %cst_27 [1] : vector<16x64xf32> to vector<16xf32>
    %40 = vector.shape_cast %39 : vector<16xf32> to vector<16x1xf32>
    %41 = vector.broadcast %35 : vector<1x1xf32> to vector<16x1xf32>
    %42 = arith.addf %40, %41 : vector<16x1xf32>
    %c0_28 = arith.constant 0 : index
    %c0_29 = arith.constant 0 : index
    %c0_30 = arith.constant 0 : index
    %43 = vector.load %arg15[%c0_28, %c0_29, %c0_30] : memref<1x16x1xf32, #tpu.memory_space<vmem>>, vector<1x16x1xf32>
    %44 = vector.shape_cast %43 : vector<1x16x1xf32> to vector<16x1xf32>
    %45 = vector.shape_cast %42 : vector<16x1xf32> to vector<1x16x1xf32>
    tpu.vector_store %arg15[%c0_28, %c0_29, %c0_30], %45 {strides = array<i32>} : memref<1x16x1xf32, #tpu.memory_space<vmem>>, vector<1x16x1xf32>,
    %46 = arith.negf %42 : vector<16x1xf32>
    %47 = math.exp %46 : vector<16x1xf32>
    %cst_31 = arith.constant 1.000000e+00 : f32
    %48 = vector.broadcast %cst_31 : f32 to vector<16x1xf32>
    %49 = arith.addf %48, %47 : vector<16x1xf32>
    %50 = arith.divf %48, %49 : vector<16x1xf32>
    %51 = vector.broadcast %50 : vector<16x1xf32> to vector<16x64xf32>
    %52 = arith.mulf %34, %51 : vector<16x64xf32>
    %53 = arith.truncf %52 : vector<16x64xf32> to vector<16x64xbf16>
    %cst_32 = arith.constant dense<0.000000e+00> : vector<2x64xf32>
    %54 = tpu.matmul %5, %53, %cst_32 {dimension_numbers = #tpu.dot_dimension_numbers<[1], [0], [0], [1], [0, 0, 1, 1], [], []>} : vector<2x16xbf16>, vector<16x64xbf16>, vector<2x64xf32> -> vector<2x64xf32>
    %55 = arith.truncf %54 : vector<2x64xf32> to vector<2x64xbf16>
    %c0_33 = arith.constant 0 : index
    %c0_34 = arith.constant 0 : index
    %56 = vector.load %arg7[%c0_33, %c0_34] : memref<64x150xbf16, #tpu.memory_space<vmem>>, vector<64x150xbf16>
    %cst_35 = arith.constant dense<0.000000e+00> : vector<2x150xf32>
    %57 = tpu.matmul %55, %56, %cst_35 {dimension_numbers = #tpu.dot_dimension_numbers<[1], [0], [0], [1], [0, 0, 1, 1], [], []>} : vector<2x64xbf16>, vector<64x150xbf16>, vector<2x150xf32> -> vector<2x150xf32>
    %58 = vector.extract_strided_slice %7 {offsets = [0, 0], sizes = [1, 150], strides = [1, 1]} : vector<2x150xf32> to vector<1x150xf32>
    %59 = vector.broadcast %58 : vector<1x150xf32> to vector<2x150xf32>
    %60 = arith.mulf %57, %59 : vector<2x150xf32>
    %61 = vector.extract_strided_slice %7 {offsets = [1, 0], sizes = [1, 150], strides = [1, 1]} : vector<2x150xf32> to vector<1x150xf32>
    %62 = vector.broadcast %61 : vector<1x150xf32> to vector<2x150xf32>
    %63 = arith.addf %60, %62 : vector<2x150xf32>
    %cst_36 = arith.constant 0.000000e+00 : f32
    %64 = vector.broadcast %cst_36 : f32 to vector<2x150xf32>
    %65 = arith.maximumf %63, %64 : vector<2x150xf32>
    %66 = arith.truncf %65 : vector<2x150xf32> to vector<2x150xbf16>
    %c0_37 = arith.constant 0 : index
    %c0_38 = arith.constant 0 : index
    %67 = vector.load %arg8[%c0_37, %c0_38] : memref<150x30xbf16, #tpu.memory_space<vmem>>, vector<150x30xbf16>
    %cst_39 = arith.constant dense<0.000000e+00> : vector<2x30xf32>
    %68 = tpu.matmul %66, %67, %cst_39 {dimension_numbers = #tpu.dot_dimension_numbers<[1], [0], [0], [1], [0, 0, 1, 1], [], []>} : vector<2x150xbf16>, vector<150x30xbf16>, vector<2x30xf32> -> vector<2x30xf32>
    %69 = vector.extract_strided_slice %8 {offsets = [0, 0], sizes = [1, 30], strides = [1, 1]} : vector<2x30xf32> to vector<1x30xf32>
    %70 = vector.broadcast %69 : vector<1x30xf32> to vector<2x30xf32>
    %71 = arith.mulf %68, %70 : vector<2x30xf32>
    %72 = vector.extract_strided_slice %8 {offsets = [1, 0], sizes = [1, 30], strides = [1, 1]} : vector<2x30xf32> to vector<1x30xf32>
    %73 = vector.broadcast %72 : vector<1x30xf32> to vector<2x30xf32>
    %74 = arith.addf %71, %73 : vector<2x30xf32>
    %cst_40 = arith.constant 0.000000e+00 : f32
    %75 = vector.broadcast %cst_40 : f32 to vector<2x30xf32>
    %76 = arith.maximumf %74, %75 : vector<2x30xf32>
    %77 = arith.truncf %76 : vector<2x30xf32> to vector<2x30xbf16>
    %c0_41 = arith.constant 0 : index
    %c0_42 = arith.constant 0 : index
    %78 = vector.load %arg9[%c0_41, %c0_42] : memref<30x67xbf16, #tpu.memory_space<vmem>>, vector<30x67xbf16>
    %cst_43 = arith.constant dense<0.000000e+00> : vector<2x67xf32>
    %79 = tpu.matmul %77, %78, %cst_43 {dimension_numbers = #tpu.dot_dimension_numbers<[1], [0], [0], [1], [0, 0, 1, 1], [], []>} : vector<2x30xbf16>, vector<30x67xbf16>, vector<2x67xf32> -> vector<2x67xf32>
    %80 = vector.extract_strided_slice %9 {offsets = [0, 0], sizes = [1, 67], strides = [1, 1]} : vector<1x68xf32> to vector<1x67xf32>
    %81 = vector.broadcast %80 : vector<1x67xf32> to vector<2x67xf32>
    %82 = arith.addf %79, %81 : vector<2x67xf32>
    %83 = arith.negf %82 : vector<2x67xf32>
    %84 = math.exp %83 : vector<2x67xf32>
    %cst_44 = arith.constant 1.000000e+00 : f32
    %85 = vector.broadcast %cst_44 : f32 to vector<2x67xf32>
    %86 = arith.addf %85, %84 : vector<2x67xf32>
    %87 = arith.divf %85, %86 : vector<2x67xf32>
    %c0_45 = arith.constant 0 : index
    %c0_46 = arith.constant 0 : index
    %c0_47 = arith.constant 0 : index
    %88 = vector.load %arg14[%c0_45, %c0_46, %c0_47] : memref<1x2x67xf32, #tpu.memory_space<vmem>>, vector<1x2x67xf32>
    %89 = vector.shape_cast %88 : vector<1x2x67xf32> to vector<2x67xf32>
    %90 = vector.shape_cast %87 : vector<2x67xf32> to vector<1x2x67xf32>
    tpu.vector_store %arg14[%c0_45, %c0_46, %c0_47], %90 {strides = array<i32>} : memref<1x2x67xf32, #tpu.memory_space<vmem>>, vector<1x2x67xf32>,
    return
  }
  func.func @transform_0(%arg0: i32) -> (i32, i32, i32) {
    %c0_i32 = arith.constant 0 : i32
    %c0_i32_0 = arith.constant 0 : i32
    %c0_i32_1 = arith.constant 0 : i32
    return %arg0, %c0_i32, %c0_i32_0 : i32, i32, i32
  }
  func.func @transform_1(%arg0: i32) -> (i32, i32, i32) {
    %c0_i32 = arith.constant 0 : i32
    %c0_i32_0 = arith.constant 0 : i32
    %c0_i32_1 = arith.constant 0 : i32
    return %arg0, %c0_i32, %c0_i32_0 : i32, i32, i32
  }
  func.func @transform_2(%arg0: i32) -> (i32, i32, i32) {
    %c0_i32 = arith.constant 0 : i32
    %c0_i32_0 = arith.constant 0 : i32
    %c0_i32_1 = arith.constant 0 : i32
    return %arg0, %c0_i32, %c0_i32_0 : i32, i32, i32
  }
  func.func @transform_3(%arg0: i32) -> (i32, i32) {
    %c0_i32 = arith.constant 0 : i32
    %c0_i32_0 = arith.constant 0 : i32
    %c0_i32_1 = arith.constant 0 : i32
    return %c0_i32, %c0_i32_0 : i32, i32
  }
  func.func @transform_4(%arg0: i32) -> (i32, i32) {
    %c0_i32 = arith.constant 0 : i32
    %c0_i32_0 = arith.constant 0 : i32
    %c0_i32_1 = arith.constant 0 : i32
    return %c0_i32, %c0_i32_0 : i32, i32
  }
  func.func @transform_5(%arg0: i32) -> (i32, i32) {
    %c0_i32 = arith.constant 0 : i32
    %c0_i32_0 = arith.constant 0 : i32
    %c0_i32_1 = arith.constant 0 : i32
    return %c0_i32, %c0_i32_0 : i32, i32
  }
  func.func @transform_6(%arg0: i32) -> (i32, i32) {
    %c0_i32 = arith.constant 0 : i32
    %c0_i32_0 = arith.constant 0 : i32
    %c0_i32_1 = arith.constant 0 : i32
    return %c0_i32, %c0_i32_0 : i32, i32
  }
  func.func @transform_7(%arg0: i32) -> (i32, i32) {
    %c0_i32 = arith.constant 0 : i32
    %c0_i32_0 = arith.constant 0 : i32
    %c0_i32_1 = arith.constant 0 : i32
    return %c0_i32, %c0_i32_0 : i32, i32
  }
  func.func @transform_8(%arg0: i32) -> (i32, i32) {
    %c0_i32 = arith.constant 0 : i32
    %c0_i32_0 = arith.constant 0 : i32
    %c0_i32_1 = arith.constant 0 : i32
    return %c0_i32, %c0_i32_0 : i32, i32
  }
  func.func @transform_9(%arg0: i32) -> (i32, i32) {
    %c0_i32 = arith.constant 0 : i32
    %c0_i32_0 = arith.constant 0 : i32
    %c0_i32_1 = arith.constant 0 : i32
    return %c0_i32, %c0_i32_0 : i32, i32
  }
  func.func @transform_10(%arg0: i32) -> (i32, i32) {
    %c0_i32 = arith.constant 0 : i32
    %c0_i32_0 = arith.constant 0 : i32
    %c0_i32_1 = arith.constant 0 : i32
    return %c0_i32, %c0_i32_0 : i32, i32
  }
  func.func @transform_11(%arg0: i32) -> (i32, i32) {
    %c0_i32 = arith.constant 0 : i32
    %c0_i32_0 = arith.constant 0 : i32
    %c0_i32_1 = arith.constant 0 : i32
    return %c0_i32, %c0_i32_0 : i32, i32
  }
  func.func @transform_12(%arg0: i32) -> (i32, i32) {
    %c0_i32 = arith.constant 0 : i32
    %c0_i32_0 = arith.constant 0 : i32
    %c0_i32_1 = arith.constant 0 : i32
    return %c0_i32, %c0_i32_0 : i32, i32
  }
  func.func @transform_13(%arg0: i32) -> (i32, i32, i32) {
    %c0_i32 = arith.constant 0 : i32
    %c0_i32_0 = arith.constant 0 : i32
    %c0_i32_1 = arith.constant 0 : i32
    return %arg0, %c0_i32, %c0_i32_0 : i32, i32, i32
  }
  func.func @transform_14(%arg0: i32) -> (i32, i32, i32) {
    %c0_i32 = arith.constant 0 : i32
    %c0_i32_0 = arith.constant 0 : i32
    %c0_i32_1 = arith.constant 0 : i32
    return %arg0, %c0_i32, %c0_i32_0 : i32, i32, i32
  }
}

</mosaic_0001>

<llo_original>
// kernel: tpu_custom_call.1
$region0: #{tpu_custom_call.1}
  #allocation0 [shape = 'u32[]', space=smem, size = 0x4, offset = 0x4, fixed_abs, tag = 'smem constant byte address 0x4 - core index']
  #allocation1 [shape = 'u32[144,128]{1,0:T(1,128)}', space=vmem, size = 0x12000, scoped, tag = 'internal scratch']
  %s0 = inlined_call_operand.vmem [shape: bf16[3,16,16], index: 0, kind: input, shape index: {}]
  %s1 = inlined_call_operand.hbm [shape: bf16[3,16,38], index: 1, kind: input, shape index: {}]
  %s2 = inlined_call_operand.hbm [shape: bf16[3,2,16], index: 2, kind: input, shape index: {}]
  %s3 = inlined_call_operand.hbm [shape: bf16[38,64], index: 3, kind: input, shape index: {}]
  %s4 = inlined_call_operand.vmem [shape: bf16[64,64], index: 4, kind: input, shape index: {}]
  %s5 = inlined_call_operand.vmem [shape: f32[1,64], index: 5, kind: input, shape index: {}]
  %s6 = inlined_call_operand.vmem [shape: bf16[64,150], index: 6, kind: input, shape index: {}]
  %s7 = inlined_call_operand.vmem [shape: bf16[150,30], index: 7, kind: input, shape index: {}]
  %s8 = inlined_call_operand.vmem [shape: bf16[30,67], index: 8, kind: input, shape index: {}]
  %s9 = inlined_call_operand.vmem [shape: f32[4,64], index: 9, kind: input, shape index: {}]
  %s10 = inlined_call_operand.vmem [shape: f32[2,150], index: 10, kind: input, shape index: {}]
  %s11 = inlined_call_operand.vmem [shape: f32[2,30], index: 11, kind: input, shape index: {}]
  %s12 = inlined_call_operand.vmem [shape: f32[1,68], index: 12, kind: input, shape index: {}]
  %s13 = inlined_call_operand.hbm [shape: f32[3,2,67], index: 13, kind: output, shape index: {0}]
  %s14 = inlined_call_operand.vmem [shape: f32[3,16,1], index: 14, kind: output, shape index: {1}]
  %15 = xla_tuple %s13, %s14
  %s16 = sld [smem:[#allocation0]]
  $region105: #{tpu_custom_call.1} parent=0
    _
  %s18 = ssub.s32 1, %s16
  %s19 = scalar_select 0, %s18, %s16
  $region1: #{tpu_custom_call.1} parent=0
    #allocation2 [shape = 'u8[8192]{0}', space=vmem, size = 0x2000, scoped, tag = 'input window, operand 1']
    #allocation3 [shape = 's32[2]{0}', space=sflag, size = 0x8, scoped, tag = 'scoped memory for tpu_custom_call.1']
    #allocation4 [shape = 's32[2]{0}', space=sflag, size = 0x8, scoped, tag = 'scoped memory for tpu_custom_call.1']
    #allocation5 [shape = 'u8[1024]{0}', space=vmem, size = 0x400, scoped, tag = 'input window, operand 2']
    #allocation6 [shape = 's32[2]{0}', space=sflag, size = 0x8, scoped, tag = 'scoped memory for tpu_custom_call.1']
    #allocation7 [shape = 'u8[10240]{0}', space=vmem, size = 0x2800, scoped, tag = 'input window, operand 3, single buffered']
    #allocation8 [shape = 'u8[2048]{0}', space=vmem, size = 0x800, scoped, tag = 'output window, operand 0']
    %20 = vsyncpa [#allocation3], 0
    %s21 = scalar_lea.sflag [#allocation3], 1
    %22 = vsyncpa %s21, 0
    %23 = vsyncpa [#allocation6], 0
    %s24 = scalar_lea.sflag [#allocation6], 1
    %25 = vsyncpa %s24, 0
    %26 = vsyncpa [#allocation4], 0
    %s27 = scalar_lea.sflag [#allocation4], 1
    %28 = vsyncpa %s27, 0
    loop: start=0, step=1, limit=5
    $region2: #{tpu_custom_call.1} parent=1 // loop_pre_header
      _
    $region3: #{tpu_custom_call.1} parent=1 // loop_header
      %s30 = sphi 0, %s34
      %p31 = scmp.ge.s32.totalorder %s30, 5
      %s40 = sphi 0, %s42
      %s43 = sphi 0, %s40
      %s44 = sphi 0, %s43
      %s60 = sphi 0, %s44
      %s66 = sphi 0, %s68
      %s69 = sphi 0, %s66
      %s70 = sphi 0, %s69
      %s86 = sphi 0, %s70
      %s92 = sphi 0, %s94
      %s95 = sphi 0, %s92
      %s96 = sphi 0, %s95
      %s112 = sphi 0, %s96
      %s116 = sphi 0, %s116
      %s118 = sphi 0, %s116
      %s119 = sphi 0, %s118
      %s133 = sphi 0, %s119
      %s137 = sphi 0, %s137
      %s139 = sphi 0, %s137
      %s140 = sphi 0, %s139
      %s154 = sphi 0, %s140
      %s158 = sphi 0, %s158
      %s160 = sphi 0, %s158
      %s161 = sphi 0, %s160
      %s175 = sphi 0, %s161
      %s179 = sphi 0, %s179
      %s181 = sphi 0, %s179
      %s182 = sphi 0, %s181
      %s196 = sphi 0, %s182
      %s200 = sphi 0, %s200
      %s202 = sphi 0, %s200
      %s203 = sphi 0, %s202
      %s217 = sphi 0, %s203
      %s221 = sphi 0, %s221
      %s223 = sphi 0, %s221
      %s224 = sphi 0, %s223
      %s238 = sphi 0, %s224
      %s242 = sphi 0, %s242
      %s244 = sphi 0, %s242
      %s245 = sphi 0, %s244
      %s259 = sphi 0, %s245
      %s263 = sphi 0, %s263
      %s265 = sphi 0, %s263
      %s266 = sphi 0, %s265
      %s280 = sphi 0, %s266
      %s284 = sphi 0, %s284
      %s286 = sphi 0, %s284
      %s287 = sphi 0, %s286
      %s301 = sphi 0, %s287
      %s305 = sphi 0, %s305
      %s307 = sphi 0, %s305
      %s308 = sphi 0, %s307
      %s322 = sphi 0, %s308
      %s328 = sphi 0, %s330
      %s331 = sphi 0, %s328
      %s332 = sphi 0, %s331
      %s348 = sphi 0, %s332
      %s354 = sphi 0, %s356
      %s357 = sphi 0, %s354
      %s358 = sphi 0, %s357
      %s374 = sphi 0, %s358
    $region4: #{tpu_custom_call.1} parent=1 // loop_header_branch
      %33 = sbr.rel (%p31) target = $region8
    $region5: #{tpu_custom_call.1} parent=1 // loop_body
      %s35 = ssub.s32 %s30, 1
      %s36 = ssub.s32 %s30, 2
      %s37 = sadd.s32 %s30, 1
      %s38 = ssub.s32 %s30, %s37
      %p39 = scmp.eq.s32.totalorder %s38, 0
      %s41 = sadd.s32 %s40, 1
      %s42 = scalar_select %p39, %s40, %s41
      %p45 = pneg %p39
      %p46 = scmp.eq.s32.totalorder %s30, 2
      %p47 = por %p45, %p46
      %p48 = scmp.ne.s32.totalorder %s40, %s43
      %p49 = scmp.eq.s32.totalorder %s30, 0
      %p50 = por %p48, %p49
      %p51 = scmp.ne.s32.totalorder %s40, %s43
      %p52 = scmp.eq.s32.totalorder %s35, 2
      %p53 = por %p51, %p52
      %p54 = scmp.ne.s32.totalorder %s43, %s44
      %p55 = scmp.eq.s32.totalorder %s35, 0
      %p56 = por %p54, %p55
      %p57 = scmp.ne.s32.totalorder %s43, %s44
      %p58 = scmp.eq.s32.totalorder %s36, 2
      %p59 = por %p57, %p58
      %p61 = scmp.ne.s32.totalorder %s44, %s60
      %p62 = scmp.eq.s32.totalorder %s36, 0
      %p63 = por %p61, %p62
      %s64 = ssub.s32 %s30, %s37
      %p65 = scmp.eq.s32.totalorder %s64, 0
      %s67 = sadd.s32 %s66, 1
      %s68 = scalar_select %p65, %s66, %s67
      %p71 = pneg %p65
      %p72 = scmp.eq.s32.totalorder %s30, 2
      %p73 = por %p71, %p72
      %p74 = scmp.ne.s32.totalorder %s66, %s69
      %p75 = scmp.eq.s32.totalorder %s30, 0
      %p76 = por %p74, %p75
      %p77 = scmp.ne.s32.totalorder %s66, %s69
      %p78 = scmp.eq.s32.totalorder %s35, 2
      %p79 = por %p77, %p78
      %p80 = scmp.ne.s32.totalorder %s69, %s70
      %p81 = scmp.eq.s32.totalorder %s35, 0
      %p82 = por %p80, %p81
      %p83 = scmp.ne.s32.totalorder %s69, %s70
      %p84 = scmp.eq.s32.totalorder %s36, 2
      %p85 = por %p83, %p84
      %p87 = scmp.ne.s32.totalorder %s70, %s86
      %p88 = scmp.eq.s32.totalorder %s36, 0
      %p89 = por %p87, %p88
      %s90 = ssub.s32 %s30, %s37
      %p91 = scmp.eq.s32.totalorder %s90, 0
      %s93 = sadd.s32 %s92, 1
      %s94 = scalar_select %p91, %s92, %s93
      %p97 = pneg %p91
      %p98 = scmp.eq.s32.totalorder %s30, 2
      %p99 = por %p97, %p98
      %p100 = scmp.ne.s32.totalorder %s92, %s95
      %p101 = scmp.eq.s32.totalorder %s30, 0
      %p102 = por %p100, %p101
      %p103 = scmp.ne.s32.totalorder %s92, %s95
      %p104 = scmp.eq.s32.totalorder %s35, 2
      %p105 = por %p103, %p104
      %p106 = scmp.ne.s32.totalorder %s95, %s96
      %p107 = scmp.eq.s32.totalorder %s35, 0
      %p108 = por %p106, %p107
      %p109 = scmp.ne.s32.totalorder %s95, %s96
      %p110 = scmp.eq.s32.totalorder %s36, 2
      %p111 = por %p109, %p110
      %p113 = scmp.ne.s32.totalorder %s96, %s112
      %p114 = scmp.eq.s32.totalorder %s36, 0
      %p115 = por %p113, %p114
      %s117 = sadd.s32 %s116, 1
      %p120 = scmp.eq.s32.totalorder %s30, 2
      %p121 = scmp.ne.s32.totalorder %s116, %s118
      %p122 = scmp.eq.s32.totalorder %s30, 0
      %p123 = por %p121, %p122
      %p124 = scmp.ne.s32.totalorder %s116, %s118
      %p125 = scmp.eq.s32.totalorder %s35, 2
      %p126 = por %p124, %p125
      %p127 = scmp.ne.s32.totalorder %s118, %s119
      %p128 = scmp.eq.s32.totalorder %s35, 0
      %p129 = por %p127, %p128
      %p130 = scmp.ne.s32.totalorder %s118, %s119
      %p131 = scmp.eq.s32.totalorder %s36, 2
      %p132 = por %p130, %p131
      %p134 = scmp.ne.s32.totalorder %s119, %s133
      %p135 = scmp.eq.s32.totalorder %s36, 0
      %p136 = por %p134, %p135
      %s138 = sadd.s32 %s137, 1
      %p141 = scmp.eq.s32.totalorder %s30, 2
      %p142 = scmp.ne.s32.totalorder %s137, %s139
      %p143 = scmp.eq.s32.totalorder %s30, 0
      %p144 = por %p142, %p143
      %p145 = scmp.ne.s32.totalorder %s137, %s139
      %p146 = scmp.eq.s32.totalorder %s35, 2
      %p147 = por %p145, %p146
      %p148 = scmp.ne.s32.totalorder %s139, %s140
      %p149 = scmp.eq.s32.totalorder %s35, 0
      %p150 = por %p148, %p149
      %p151 = scmp.ne.s32.totalorder %s139, %s140
      %p152 = scmp.eq.s32.totalorder %s36, 2
      %p153 = por %p151, %p152
      %p155 = scmp.ne.s32.totalorder %s140, %s154
      %p156 = scmp.eq.s32.totalorder %s36, 0
      %p157 = por %p155, %p156
      %s159 = sadd.s32 %s158, 1
      %p162 = scmp.eq.s32.totalorder %s30, 2
      %p163 = scmp.ne.s32.totalorder %s158, %s160
      %p164 = scmp.eq.s32.totalorder %s30, 0
      %p165 = por %p163, %p164
      %p166 = scmp.ne.s32.totalorder %s158, %s160
      %p167 = scmp.eq.s32.totalorder %s35, 2
      %p168 = por %p166, %p167
      %p169 = scmp.ne.s32.totalorder %s160, %s161
      %p170 = scmp.eq.s32.totalorder %s35, 0
      %p171 = por %p169, %p170
      %p172 = scmp.ne.s32.totalorder %s160, %s161
      %p173 = scmp.eq.s32.totalorder %s36, 2
      %p174 = por %p172, %p173
      %p176 = scmp.ne.s32.totalorder %s161, %s175
      %p177 = scmp.eq.s32.totalorder %s36, 0
      %p178 = por %p176, %p177
      %s180 = sadd.s32 %s179, 1
      %p183 = scmp.eq.s32.totalorder %s30, 2
      %p184 = scmp.ne.s32.totalorder %s179, %s181
      %p185 = scmp.eq.s32.totalorder %s30, 0
      %p186 = por %p184, %p185
      %p187 = scmp.ne.s32.totalorder %s179, %s181
      %p188 = scmp.eq.s32.totalorder %s35, 2
      %p189 = por %p187, %p188
      %p190 = scmp.ne.s32.totalorder %s181, %s182
      %p191 = scmp.eq.s32.totalorder %s35, 0
      %p192 = por %p190, %p191
      %p193 = scmp.ne.s32.totalorder %s181, %s182
      %p194 = scmp.eq.s32.totalorder %s36, 2
      %p195 = por %p193, %p194
      %p197 = scmp.ne.s32.totalorder %s182, %s196
      %p198 = scmp.eq.s32.totalorder %s36, 0
      %p199 = por %p197, %p198
      %s201 = sadd.s32 %s200, 1
      %p204 = scmp.eq.s32.totalorder %s30, 2
      %p205 = scmp.ne.s32.totalorder %s200, %s202
      %p206 = scmp.eq.s32.totalorder %s30, 0
      %p207 = por %p205, %p206
      %p208 = scmp.ne.s32.totalorder %s200, %s202
      %p209 = scmp.eq.s32.totalorder %s35, 2
      %p210 = por %p208, %p209
      %p211 = scmp.ne.s32.totalorder %s202, %s203
      %p212 = scmp.eq.s32.totalorder %s35, 0
      %p213 = por %p211, %p212
      %p214 = scmp.ne.s32.totalorder %s202, %s203
      %p215 = scmp.eq.s32.totalorder %s36, 2
      %p216 = por %p214, %p215
      %p218 = scmp.ne.s32.totalorder %s203, %s217
      %p219 = scmp.eq.s32.totalorder %s36, 0
      %p220 = por %p218, %p219
      %s222 = sadd.s32 %s221, 1
      %p225 = scmp.eq.s32.totalorder %s30, 2
      %p226 = scmp.ne.s32.totalorder %s221, %s223
      %p227 = scmp.eq.s32.totalorder %s30, 0
      %p228 = por %p226, %p227
      %p229 = scmp.ne.s32.totalorder %s221, %s223
      %p230 = scmp.eq.s32.totalorder %s35, 2
      %p231 = por %p229, %p230
      %p232 = scmp.ne.s32.totalorder %s223, %s224
      %p233 = scmp.eq.s32.totalorder %s35, 0
      %p234 = por %p232, %p233
      %p235 = scmp.ne.s32.totalorder %s223, %s224
      %p236 = scmp.eq.s32.totalorder %s36, 2
      %p237 = por %p235, %p236
      %p239 = scmp.ne.s32.totalorder %s224, %s238
      %p240 = scmp.eq.s32.totalorder %s36, 0
      %p241 = por %p239, %p240
      %s243 = sadd.s32 %s242, 1
      %p246 = scmp.eq.s32.totalorder %s30, 2
      %p247 = scmp.ne.s32.totalorder %s242, %s244
      %p248 = scmp.eq.s32.totalorder %s30, 0
      %p249 = por %p247, %p248
      %p250 = scmp.ne.s32.totalorder %s242, %s244
      %p251 = scmp.eq.s32.totalorder %s35, 2
      %p252 = por %p250, %p251
      %p253 = scmp.ne.s32.totalorder %s244, %s245
      %p254 = scmp.eq.s32.totalorder %s35, 0
      %p255 = por %p253, %p254
      %p256 = scmp.ne.s32.totalorder %s244, %s245
      %p257 = scmp.eq.s32.totalorder %s36, 2
      %p258 = por %p256, %p257
      %p260 = scmp.ne.s32.totalorder %s245, %s259
      %p261 = scmp.eq.s32.totalorder %s36, 0
      %p262 = por %p260, %p261
      %s264 = sadd.s32 %s263, 1
      %p267 = scmp.eq.s32.totalorder %s30, 2
      %p268 = scmp.ne.s32.totalorder %s263, %s265
      %p269 = scmp.eq.s32.totalorder %s30, 0
      %p270 = por %p268, %p269
      %p271 = scmp.ne.s32.totalorder %s263, %s265
      %p272 = scmp.eq.s32.totalorder %s35, 2
      %p273 = por %p271, %p272
      %p274 = scmp.ne.s32.totalorder %s265, %s266
      %p275 = scmp.eq.s32.totalorder %s35, 0
      %p276 = por %p274, %p275
      %p277 = scmp.ne.s32.totalorder %s265, %s266
      %p278 = scmp.eq.s32.totalorder %s36, 2
      %p279 = por %p277, %p278
      %p281 = scmp.ne.s32.totalorder %s266, %s280
      %p282 = scmp.eq.s32.totalorder %s36, 0
      %p283 = por %p281, %p282
      %s285 = sadd.s32 %s284, 1
      %p288 = scmp.eq.s32.totalorder %s30, 2
      %p289 = scmp.ne.s32.totalorder %s284, %s286
      %p290 = scmp.eq.s32.totalorder %s30, 0
      %p291 = por %p289, %p290
      %p292 = scmp.ne.s32.totalorder %s284, %s286
      %p293 = scmp.eq.s32.totalorder %s35, 2
      %p294 = por %p292, %p293
      %p295 = scmp.ne.s32.totalorder %s286, %s287
      %p296 = scmp.eq.s32.totalorder %s35, 0
      %p297 = por %p295, %p296
      %p298 = scmp.ne.s32.totalorder %s286, %s287
      %p299 = scmp.eq.s32.totalorder %s36, 2
      %p300 = por %p298, %p299
      %p302 = scmp.ne.s32.totalorder %s287, %s301
      %p303 = scmp.eq.s32.totalorder %s36, 0
      %p304 = por %p302, %p303
      %s306 = sadd.s32 %s305, 1
      %p309 = scmp.eq.s32.totalorder %s30, 2
      %p310 = scmp.ne.s32.totalorder %s305, %s307
      %p311 = scmp.eq.s32.totalorder %s30, 0
      %p312 = por %p310, %p311
      %p313 = scmp.ne.s32.totalorder %s305, %s307
      %p314 = scmp.eq.s32.totalorder %s35, 2
      %p315 = por %p313, %p314
      %p316 = scmp.ne.s32.totalorder %s307, %s308
      %p317 = scmp.eq.s32.totalorder %s35, 0
      %p318 = por %p316, %p317
      %p319 = scmp.ne.s32.totalorder %s307, %s308
      %p320 = scmp.eq.s32.totalorder %s36, 2
      %p321 = por %p319, %p320
      %p323 = scmp.ne.s32.totalorder %s308, %s322
      %p324 = scmp.eq.s32.totalorder %s36, 0
      %p325 = por %p323, %p324
      %s326 = ssub.s32 %s30, %s37
      %p327 = scmp.eq.s32.totalorder %s326, 0
      %s329 = sadd.s32 %s328, 1
      %s330 = scalar_select %p327, %s328, %s329
      %p333 = pneg %p327
      %p334 = scmp.eq.s32.totalorder %s30, 2
      %p335 = por %p333, %p334
      %p336 = scmp.ne.s32.totalorder %s328, %s331
      %p337 = scmp.eq.s32.totalorder %s30, 0
      %p338 = por %p336, %p337
      %p339 = scmp.ne.s32.totalorder %s328, %s331
      %p340 = scmp.eq.s32.totalorder %s35, 2
      %p341 = por %p339, %p340
      %p342 = scmp.ne.s32.totalorder %s331, %s332
      %p343 = scmp.eq.s32.totalorder %s35, 0
      %p344 = por %p342, %p343
      %p345 = scmp.ne.s32.totalorder %s331, %s332
      %p346 = scmp.eq.s32.totalorder %s36, 2
      %p347 = por %p345, %p346
      %p349 = scmp.ne.s32.totalorder %s332, %s348
      %p350 = scmp.eq.s32.totalorder %s36, 0
      %p351 = por %p349, %p350
      %s352 = ssub.s32 %s30, %s37
      %p353 = scmp.eq.s32.totalorder %s352, 0
      %s355 = sadd.s32 %s354, 1
      %s356 = scalar_select %p353, %s354, %s355
      %p359 = pneg %p353
      %p360 = scmp.eq.s32.totalorder %s30, 2
      %p361 = por %p359, %p360
      %p362 = scmp.ne.s32.totalorder %s354, %s357
      %p363 = scmp.eq.s32.totalorder %s30, 0
      %p364 = por %p362, %p363
      %p365 = scmp.ne.s32.totalorder %s354, %s357
      %p366 = scmp.eq.s32.totalorder %s35, 2
      %p367 = por %p365, %p366
      %p368 = scmp.ne.s32.totalorder %s357, %s358
      %p369 = scmp.eq.s32.totalorder %s35, 0
      %p370 = por %p368, %p369
      %p371 = scmp.ne.s32.totalorder %s357, %s358
      %p372 = scmp.eq.s32.totalorder %s36, 2
      %p373 = por %p371, %p372
      %p375 = scmp.ne.s32.totalorder %s358, %s374
      %p376 = scmp.eq.s32.totalorder %s36, 0
      %p377 = por %p375, %p376
      %p378 = scmp.le.s32.totalorder 1, %s30
      %p379 = scmp.lt.s32.totalorder %s30, 4
      %p380 = pnand %p378, %p379
      %p381 = pneg %p380
      // Predicated region
      $region9: #{tpu_custom_call.1} parent=5 // pred_check
        _
      $region10: #{tpu_custom_call.1} parent=5 // pred_check_branch
        %383 = sbr.rel (%p380) target = $region12
      $region11: #{tpu_custom_call.1} parent=5 // pred_region
        %s384 = ssub.s32 %s30, 1
        // Predicated region
        $region13: #{tpu_custom_call.1} parent=11 // pred_check
          %p385 = pneg %p129
        $region14: #{tpu_custom_call.1} parent=11 // pred_check_branch
          %387 = sbr.rel (%p385) target = $region16
        $region15: #{tpu_custom_call.1} parent=11 // pred_region
          %s389 = ssub.s32 320, 320
          %390 = vsyncadd [#allocation6], %s389
          %s391 = sshll.u32 [#allocation7], 4
          %s392 = int_to_ptr.vmem [resolvable:$true] %s391
          %397 = dma.hbm_to_vmem [thread:$0]  %s3, 320, %s392, [#allocation6], 64, 64, 4
        $region16: #{tpu_custom_call.1} parent=11 // pred_fallthru
          _
        // Predicated region
        $region17: #{tpu_custom_call.1} parent=11 // pred_check
          %p398 = pneg %p150
        $region18: #{tpu_custom_call.1} parent=11 // pred_check_branch
          %400 = sbr.rel (%p398) target = $region20
        $region19: #{tpu_custom_call.1} parent=11 // pred_region
          _
        $region20: #{tpu_custom_call.1} parent=11 // pred_fallthru
          _
        // Predicated region
        $region21: #{tpu_custom_call.1} parent=11 // pred_check
          %p401 = pneg %p171
        $region22: #{tpu_custom_call.1} parent=11 // pred_check_branch
          %403 = sbr.rel (%p401) target = $region24
        $region23: #{tpu_custom_call.1} parent=11 // pred_region
          _
        $region24: #{tpu_custom_call.1} parent=11 // pred_fallthru
          _
        // Predicated region
        $region25: #{tpu_custom_call.1} parent=11 // pred_check
          %p404 = pneg %p192
        $region26: #{tpu_custom_call.1} parent=11 // pred_check_branch
          %406 = sbr.rel (%p404) target = $region28
        $region27: #{tpu_custom_call.1} parent=11 // pred_region
          _
        $region28: #{tpu_custom_call.1} parent=11 // pred_fallthru
          _
        // Predicated region
        $region29: #{tpu_custom_call.1} parent=11 // pred_check
          %p407 = pneg %p213
        $region30: #{tpu_custom_call.1} parent=11 // pred_check_branch
          %409 = sbr.rel (%p407) target = $region32
        $region31: #{tpu_custom_call.1} parent=11 // pred_region
          _
        $region32: #{tpu_custom_call.1} parent=11 // pred_fallthru
          _
        // Predicated region
        $region33: #{tpu_custom_call.1} parent=11 // pred_check
          %p410 = pneg %p234
        $region34: #{tpu_custom_call.1} parent=11 // pred_check_branch
          %412 = sbr.rel (%p410) target = $region36
        $region35: #{tpu_custom_call.1} parent=11 // pred_region
          _
        $region36: #{tpu_custom_call.1} parent=11 // pred_fallthru
          _
        // Predicated region
        $region37: #{tpu_custom_call.1} parent=11 // pred_check
          %p413 = pneg %p255
        $region38: #{tpu_custom_call.1} parent=11 // pred_check_branch
          %415 = sbr.rel (%p413) target = $region40
        $region39: #{tpu_custom_call.1} parent=11 // pred_region
          _
        $region40: #{tpu_custom_call.1} parent=11 // pred_fallthru
          _
        // Predicated region
        $region41: #{tpu_custom_call.1} parent=11 // pred_check
          %p416 = pneg %p276
        $region42: #{tpu_custom_call.1} parent=11 // pred_check_branch
          %418 = sbr.rel (%p416) target = $region44
        $region43: #{tpu_custom_call.1} parent=11 // pred_region
          _
        $region44: #{tpu_custom_call.1} parent=11 // pred_fallthru
          _
        // Predicated region
        $region45: #{tpu_custom_call.1} parent=11 // pred_check
          %p419 = pneg %p297
        $region46: #{tpu_custom_call.1} parent=11 // pred_check_branch
          %421 = sbr.rel (%p419) target = $region48
        $region47: #{tpu_custom_call.1} parent=11 // pred_region
          _
        $region48: #{tpu_custom_call.1} parent=11 // pred_fallthru
          _
        // Predicated region
        $region49: #{tpu_custom_call.1} parent=11 // pred_check
          %p422 = pneg %p318
        $region50: #{tpu_custom_call.1} parent=11 // pred_check_branch
          %424 = sbr.rel (%p422) target = $region52
        $region51: #{tpu_custom_call.1} parent=11 // pred_region
          _
        $region52: #{tpu_custom_call.1} parent=11 // pred_fallthru
          _
      $region12: #{tpu_custom_call.1} parent=5 // pred_fallthru
        _
      %p425 = scmp.lt.s32.totalorder %s30, 3
      // Predicated region
      $region53: #{tpu_custom_call.1} parent=5 // pred_check
        %p426 = pneg %p425
      $region54: #{tpu_custom_call.1} parent=5 // pred_check_branch
        %428 = sbr.rel (%p426) target = $region56
      $region55: #{tpu_custom_call.1} parent=5 // pred_region
        // Predicated region
        $region57: #{tpu_custom_call.1} parent=55 // pred_check
          %p429 = pneg %p50
        $region58: #{tpu_custom_call.1} parent=55 // pred_check_branch
          %431 = sbr.rel (%p429) target = $region60
        $region59: #{tpu_custom_call.1} parent=55 // pred_region
          %p432 = scmp.lt.s32.totalorder %s30, 2
          %s433 = scalar_select %p432, %s30, 2
          %s434 = smul.addr %s433, 2
          %s435 = smul.addr %s434, 4
          %s436 = scalar_lea.vmem %s0, %s435
        $region60: #{tpu_custom_call.1} parent=55 // pred_fallthru
          _
        // Predicated region
        $region61: #{tpu_custom_call.1} parent=55 // pred_check
          %p437 = pneg %p76
        $region62: #{tpu_custom_call.1} parent=55 // pred_check_branch
          %439 = sbr.rel (%p437) target = $region64
        $region63: #{tpu_custom_call.1} parent=55 // pred_region
          %s440 = sand.u32 %s66, 1
          %s441 = scalar_lea.sflag [#allocation3], %s440
          %s442 = sand.u32 %s66, 1
          %s443 = smul.addr %s442, 8
          %s444 = scalar_lea.vmem [#allocation2], %s443
          %s446 = ssub.s32 128, 128
          %447 = vsyncadd %s441, %s446
          %s448 = smul.addr %s30, 2
          %s449 = smul.addr %s448, 64
          %s450 = scalar_lea.hbm %s1, %s449
          %s451 = sshll.u32 %s444, 4
          %s452 = int_to_ptr.vmem [resolvable:$true] %s451
          %457 = dma.hbm_to_vmem [thread:$0]  %s450, 128, %s452, %s441, 64, 64, 4
        $region64: #{tpu_custom_call.1} parent=55 // pred_fallthru
          _
        // Predicated region
        $region65: #{tpu_custom_call.1} parent=55 // pred_check
          %p458 = pneg %p102
        $region66: #{tpu_custom_call.1} parent=55 // pred_check_branch
          %460 = sbr.rel (%p458) target = $region68
        $region67: #{tpu_custom_call.1} parent=55 // pred_region
          %s461 = sand.u32 %s30, 1
          %s462 = scalar_lea.sflag [#allocation6], %s461
          %s463 = sand.u32 %s92, 1
          %s464 = scalar_lea.vmem [#allocation5], %s463
          %s466 = ssub.s32 16, 16
          %467 = vsyncadd %s462, %s466
          %s468 = smul.addr %s30, 16
          %s469 = scalar_lea.hbm %s2, %s468
          %s471 = sshll.u32 %s464, 4
          %s472 = int_to_ptr.vmem [resolvable:$true] %s471
          %474 = dma.hbm_to_vmem [thread:$0]  %s469, 16, %s472, %s462
        $region68: #{tpu_custom_call.1} parent=55 // pred_fallthru
          _
      $region56: #{tpu_custom_call.1} parent=5 // pred_fallthru
        _
      %p475 = scmp.le.s32.totalorder 1, %s30
      %p476 = scmp.lt.s32.totalorder %s30, 4
      %p477 = pnand %p475, %p476
      %p478 = pneg %p477
      // Predicated region
      $region69: #{tpu_custom_call.1} parent=5 // pred_check
        _
      $region70: #{tpu_custom_call.1} parent=5 // pred_check_branch
        %480 = sbr.rel (%p477) target = $region72
      $region71: #{tpu_custom_call.1} parent=5 // pred_region
        %s481 = ssub.s32 %s30, 1
        %s482 = sand.u32 %s69, 1
        %s483 = scalar_lea.sflag [#allocation3], %s482
        %s484 = sand.u32 %s69, 1
        %s485 = smul.addr %s484, 8
        %s486 = scalar_lea.vmem [#allocation2], %s485
        // Predicated region
        $region73: #{tpu_custom_call.1} parent=71 // pred_check
          %p487 = pneg %p82
        $region74: #{tpu_custom_call.1} parent=71 // pred_check_branch
          %489 = sbr.rel (%p487) target = $region76
        $region75: #{tpu_custom_call.1} parent=71 // pred_region
          %490 = dma.done %s483, 128
        $region76: #{tpu_custom_call.1} parent=71 // pred_fallthru
          _
        %s491 = sand.u32 %s35, 1
        %s492 = scalar_lea.sflag [#allocation6], %s491
        %s493 = sand.u32 %s95, 1
        %s494 = scalar_lea.vmem [#allocation5], %s493
        // Predicated region
        $region77: #{tpu_custom_call.1} parent=71 // pred_check
          %p495 = pneg %p108
        $region78: #{tpu_custom_call.1} parent=71 // pred_check_branch
          %497 = sbr.rel (%p495) target = $region80
        $region79: #{tpu_custom_call.1} parent=71 // pred_region
          %498 = dma.done %s492, 16
        $region80: #{tpu_custom_call.1} parent=71 // pred_fallthru
          _
        // Predicated region
        $region81: #{tpu_custom_call.1} parent=71 // pred_check
          %p499 = pneg %p129
        $region82: #{tpu_custom_call.1} parent=71 // pred_check_branch
          %501 = sbr.rel (%p499) target = $region84
        $region83: #{tpu_custom_call.1} parent=71 // pred_region
          %502 = dma.done [#allocation6], 320
        $region84: #{tpu_custom_call.1} parent=71 // pred_fallthru
          _
        %p503 = scmp.lt.s32.totalorder %s35, 2
        %s504 = scalar_select %p503, %s35, 2
        %s505 = smul.addr %s504, 2
        %s506 = smul.addr %s505, 4
        %s507 = scalar_lea.vmem %s0, %s506
        %p508 = pneg %p56
        %p509 = pneg %p53
        %s510 = sand.u32 %s69, 1
        %s511 = scalar_lea.sflag [#allocation3], %s510
        %s512 = sand.u32 %s69, 1
        %s513 = smul.addr %s512, 8
        %s514 = scalar_lea.vmem [#allocation2], %s513
        %p515 = pneg %p82
        %p516 = pneg %p79
        %s517 = sand.u32 %s35, 1
        %s518 = scalar_lea.sflag [#allocation6], %s517
        %s519 = sand.u32 %s95, 1
        %s520 = scalar_lea.vmem [#allocation5], %s519
        %p521 = pneg %p108
        %p522 = pneg %p105
        %p523 = pneg %p129
        %p524 = pneg %p126
        %p525 = pneg %p150
        %p526 = pneg %p147
        %p527 = pneg %p171
        %p528 = pneg %p168
        %p529 = pneg %p192
        %p530 = pneg %p189
        %p531 = pneg %p213
        %p532 = pneg %p210
        %p533 = pneg %p234
        %p534 = pneg %p231
        %p535 = pneg %p255
        %p536 = pneg %p252
        %p537 = pneg %p276
        %p538 = pneg %p273
        %p539 = pneg %p297
        %p540 = pneg %p294
        %p541 = pneg %p318
        %p542 = pneg %p315
        %p543 = pneg %p344
        %p544 = pneg %p341
        %s545 = sand.u32 %s331, 1
        %s546 = scalar_lea.sflag [#allocation4], %s545
        %s547 = sand.u32 %s331, 1
        %s548 = smul.addr %s547, 2
        %s549 = scalar_lea.vmem [#allocation8], %s548
        %p550 = pneg %p370
        %p551 = pneg %p367
        %p552 = scmp.lt.s32.totalorder %s35, 2
        %s553 = scalar_select %p552, %s35, 2
        %s554 = smul.addr %s553, 2
        %s555 = smul.addr %s554, 8
        %s556 = scalar_lea.vmem %s14, %s555
        %p557 = scmp.lt.s32.totalorder %s35, 2
        %s558 = scalar_select %p557, %s35, 2
        %s559 = smul.addr %s558, 2
        %s560 = smul.addr %s559, 4
        %s561 = scalar_lea.vmem %s0, %s560
        %p562 = scmp.lt.s32.totalorder %s35, 2
        %s563 = scalar_select %p562, %s35, 2
        %s564 = smul.addr %s563, 2
        %s565 = smul.addr %s564, 8
        %s566 = scalar_lea.vmem %s14, %s565
        %v568 = vld [vmem:[%s561] sm:$0xf]
        %v569 = vld [vmem:[%s561 + $0x4] sm:$0xf]
        %v570 = vld [vmem:[%s486] sm:$0xf]
        %v571 = vld [vmem:[%s486 + $0x4] sm:$0xf]
        %v572 = vld [vmem:[%s494] sm:$0x1]
        %v573 = vld [vmem:[%s9] sm:$0xf]
        %v574 = vld [vmem:[%s10] sm:$0xf]
        %v575 = vld [vmem:[%s11] sm:$0x3]
        %v576 = vld [vmem:[%s12] sm:$0x1]
        %v579 = vunpack.c.l.b16 %v568
        %v580 = vunpack.c.l.b16 %v569
        %v581 = vpack.c.b16 %v580, %v579
        %v584 = vunpack.c.l.b16 %v570
        %v585 = vunpack.c.l.b16 %v571
        %v586 = vpack.c.b16 %v585, %v584
        %vm588 = vcmask 130048
        %v590 = vsel %vm588, %v581, 0
        %592 = vmatprep.subr.bf16.mxu0 0
        %593 = vmatpush1.bf16.msra.mxu0 %v586
        %594 = vmatprep.subr.bf16.mxu0 0
        %595 = vmatpush1.bf16.msra.mxu0 0
        %596 = vmatprep.subr.bf16.mxu0 0
        %597 = vmatpush1.bf16.msra.mxu0 0
        %598 = vmatprep.subr.bf16.mxu0 0
        %599 = vmatpush1.bf16.msra.mxu0 0
        %600 = vmatprep.subr.bf16.mxu0 0
        %601 = vmatpush1.bf16.msra.mxu0 0
        %602 = vmatprep.subr.bf16.mxu0 0
        %603 = vmatpush1.bf16.msra.mxu0 0
        %604 = vmatprep.subr.bf16.mxu0 0
        %605 = vmatpush1.bf16.msra.mxu0 0
        %606 = vmatprep.subr.bf16.mxu0 0
        %607 = vmatpush1.bf16.msra.mxu0 0
        %608 = vmatprep.subr.bf16.mxu0 0
        %609 = vmatpush1.bf16.msra.mxu0 0
        %610 = vmatprep.subr.bf16.mxu0 0
        %611 = vmatpush1.bf16.msra.mxu0 0
        %612 = vmatprep.subr.bf16.mxu0 0
        %613 = vmatpush1.bf16.msra.mxu0 0
        %614 = vmatprep.subr.bf16.mxu0 0
        %615 = vmatpush1.bf16.msra.mxu0 0
        %616 = vmatprep.subr.bf16.mxu0 0
        %617 = vmatpush1.bf16.msra.mxu0 0
        %618 = vmatprep.subr.bf16.mxu0 0
        %619 = vmatpush1.bf16.msra.mxu0 0
        %620 = vmatprep.subr.bf16.mxu0 0
        %621 = vmatpush1.bf16.msra.mxu0 0
        %622 = vmatprep.subr.bf16.mxu0 0
        %623 = vmatpush1.bf16.msra.mxu0 0
        %624 = vmatprep.mubr.bf16.mxu0 0
        %625 = vmatmul.mubr.bf16.gmra.mrb[0].mxu0 %v590
        %v626 = vpop.f32.mrb[0].mxu0
        %v627 = vadd.f32 0.0, %v626
        %v628 = vpop.f32.mrb[0].mxu0
        %v629 = vpop.f32.mrb[0].mxu0
        %v630 = vadd.f32 0.0, %v629
        %v631 = vpop.f32.mrb[0].mxu0
        %632 = vdwg.mxu0
        %v633 = vpack.c.bf16 %v630, %v627
        %v634 = vld [vmem:[#allocation7] sm:$0xf]
        %v635 = vld [vmem:[#allocation7 + $0x4] sm:$0xf]
        %v636 = vld [vmem:[#allocation7 + $0x8] sm:$0xf]
        %v637 = vld [vmem:[#allocation7 + $0xc] sm:$0xf]
        %v638 = vld [vmem:[#allocation7 + $0x10] sm:$0x7]
        %v644 = vunpack.c.l.b16 %v634
        %v645 = vunpack.c.l.b16 %v635
        %v646 = vunpack.c.l.b16 %v636
        %v647 = vunpack.c.l.b16 %v637
        %v648 = vunpack.c.l.b16 %v638
        %v649 = vpack.c.b16 %v645, %v644
        %v650 = vpack.c.b16 %v647, %v646
        %v651 = vpack.c.b16 %v648, %v648
        %vm654 = vcmask 310272
        %v656 = vsel %vm654, %v633, 0
        %vm658 = vcmask 1042432
        %v660 = vsel %vm658, %v651, 0
        %662 = vmatprep.subr.bf16.mxu0 0
        %663 = vmatpush1.bf16.msra.mxu0 %v649
        %664 = vmatprep.subr.bf16.mxu0 0
        %665 = vmatpush1.bf16.msra.mxu0 %v650
        %666 = vmatprep.subr.bf16.mxu0 0
        %667 = vmatpush1.bf16.msra.mxu0 %v660
        %668 = vmatprep.subr.bf16.mxu0 0
        %669 = vmatpush1.bf16.msra.mxu0 0
        %670 = vmatprep.subr.bf16.mxu0 0
        %671 = vmatpush1.bf16.msra.mxu0 0
        %672 = vmatprep.subr.bf16.mxu0 0
        %673 = vmatpush1.bf16.msra.mxu0 0
        %674 = vmatprep.subr.bf16.mxu0 0
        %675 = vmatpush1.bf16.msra.mxu0 0
        %676 = vmatprep.subr.bf16.mxu0 0
        %677 = vmatpush1.bf16.msra.mxu0 0
        %678 = vmatprep.subr.bf16.mxu0 0
        %679 = vmatpush1.bf16.msra.mxu0 0
        %680 = vmatprep.subr.bf16.mxu0 0
        %681 = vmatpush1.bf16.msra.mxu0 0
        %682 = vmatprep.subr.bf16.mxu0 0
        %683 = vmatpush1.bf16.msra.mxu0 0
        %684 = vmatprep.subr.bf16.mxu0 0
        %685 = vmatpush1.bf16.msra.mxu0 0
        %686 = vmatprep.subr.bf16.mxu0 0
        %687 = vmatpush1.bf16.msra.mxu0 0
        %688 = vmatprep.subr.bf16.mxu0 0
        %689 = vmatpush1.bf16.msra.mxu0 0
        %690 = vmatprep.subr.bf16.mxu0 0
        %691 = vmatpush1.bf16.msra.mxu0 0
        %692 = vmatprep.subr.bf16.mxu0 0
        %693 = vmatpush1.bf16.msra.mxu0 0
        %694 = vmatprep.mubr.bf16.mxu0 0
        %695 = vmatmul.mubr.bf16.gmra.mrb[0].mxu0 %v656
        %v696 = vpop.f32.mrb[0].mxu0
        %v697 = vadd.f32 0.0, %v696
        %v698 = vpop.f32.mrb[0].mxu0
        %v699 = vpop.f32.mrb[0].mxu0
        %v700 = vadd.f32 0.0, %v699
        %v701 = vpop.f32.mrb[0].mxu0
        %702 = vdwg.mxu0
        %v703 = vlaneseq
        %v704 = vshrl.u32 %v703, 7
        %v705 = vsub.s32 0, %v704
        %v706 = vrot.slane %v573, %v705
        %v707 = vmul.f32 %v697, %v706
        %v708 = vmul.f32 %v700, %v706
        %v709 = vlaneseq
        %v710 = vshrl.u32 %v709, 7
        %v711 = vsub.s32 1, %v710
        %v712 = vrot.slane %v573, %v711
        %v713 = vadd.f32 %v707, %v712
        %v714 = vadd.f32 %v708, %v712
        %v715 = vmax.f32 %v713, 0.0
        %v716 = vmax.f32 %v714, 0.0
        %v717 = vpack.c.bf16 %v716, %v715
        %718 = vmatprep.subr.bf16.mxu0 0
        %719 = vmatpush1.bf16.msra.mxu0 %v717
        %720 = vmatprep.subr.bf16.mxu0 0
        %721 = vmatpush1.bf16.msra.mxu0 0
        %722 = vmatprep.subr.bf16.mxu0 0
        %723 = vmatpush1.bf16.msra.mxu0 0
        %724 = vmatprep.subr.bf16.mxu0 0
        %725 = vmatpush1.bf16.msra.mxu0 0
        %726 = vmatprep.subr.bf16.mxu0 0
        %727 = vmatpush1.bf16.msra.mxu0 0
        %728 = vmatprep.subr.bf16.mxu0 0
        %729 = vmatpush1.bf16.msra.mxu0 0
        %730 = vmatprep.subr.bf16.mxu0 0
        %731 = vmatpush1.bf16.msra.mxu0 0
        %732 = vmatprep.subr.bf16.mxu0 0
        %733 = vmatpush1.bf16.msra.mxu0 0
        %734 = vmatprep.subr.bf16.mxu0 0
        %735 = vmatpush1.bf16.msra.mxu0 0
        %736 = vmatprep.subr.bf16.mxu0 0
        %737 = vmatpush1.bf16.msra.mxu0 0
        %738 = vmatprep.subr.bf16.mxu0 0
        %739 = vmatpush1.bf16.msra.mxu0 0
        %740 = vmatprep.subr.bf16.mxu0 0
        %741 = vmatpush1.bf16.msra.mxu0 0
        %742 = vmatprep.subr.bf16.mxu0 0
        %743 = vmatpush1.bf16.msra.mxu0 0
        %744 = vmatprep.subr.bf16.mxu0 0
        %745 = vmatpush1.bf16.msra.mxu0 0
        %746 = vmatprep.subr.bf16.mxu0 0
        %747 = vmatpush1.bf16.msra.mxu0 0
        %748 = vmatprep.subr.bf16.mxu0 0
        %749 = vmatpush1.bf16.msra.mxu0 0
        %750 = vmatprep.mubr.bf16.mxu0 0
        %751 = vmatmul.mubr.bf16.gmra.mrb[0].mxu0 %v590
        %v752 = vpop.f32.mrb[0].mxu0
        %v753 = vadd.f32 0.0, %v752
        %v754 = vpop.f32.mrb[0].mxu0
        %v755 = vpop.f32.mrb[0].mxu0
        %v756 = vadd.f32 0.0, %v755
        %v757 = vpop.f32.mrb[0].mxu0
        %758 = vdwg.mxu0
        %v759 = vpack.c.bf16 %v756, %v753
        %v760 = vld [vmem:[%s4] sm:$0xf]
        %v761 = vld [vmem:[%s4 + $0x4] sm:$0xf]
        %v762 = vld [vmem:[%s4 + $0x8] sm:$0xf]
        %v763 = vld [vmem:[%s4 + $0xc] sm:$0xf]
        %v764 = vld [vmem:[%s4 + $0x10] sm:$0xf]
        %v765 = vld [vmem:[%s4 + $0x14] sm:$0xf]
        %v766 = vld [vmem:[%s4 + $0x18] sm:$0xf]
        %v767 = vld [vmem:[%s4 + $0x1c] sm:$0xf]
        %v776 = vunpack.c.l.b16 %v760
        %v777 = vunpack.c.l.b16 %v761
        %v778 = vunpack.c.l.b16 %v762
        %v779 = vunpack.c.l.b16 %v763
        %v780 = vunpack.c.l.b16 %v764
        %v781 = vunpack.c.l.b16 %v765
        %v782 = vunpack.c.l.b16 %v766
        %v783 = vunpack.c.l.b16 %v767
        %v784 = vpack.c.b16 %v777, %v776
        %v785 = vpack.c.b16 %v779, %v778
        %v786 = vpack.c.b16 %v781, %v780
        %v787 = vpack.c.b16 %v783, %v782
        %vm792 = vcmask 523264
        %v794 = vsel %vm792, %v759, 0
        %796 = vmatprep.subr.bf16.mxu0 0
        %797 = vmatpush1.bf16.msra.mxu0 %v784
        %798 = vmatprep.subr.bf16.mxu0 0
        %799 = vmatpush1.bf16.msra.mxu0 %v785
        %800 = vmatprep.subr.bf16.mxu0 0
        %801 = vmatpush1.bf16.msra.mxu0 %v786
        %802 = vmatprep.subr.bf16.mxu0 0
        %803 = vmatpush1.bf16.msra.mxu0 %v787
        %804 = vmatprep.subr.bf16.mxu0 0
        %805 = vmatpush1.bf16.msra.mxu0 0
        %806 = vmatprep.subr.bf16.mxu0 0
        %807 = vmatpush1.bf16.msra.mxu0 0
        %808 = vmatprep.subr.bf16.mxu0 0
        %809 = vmatpush1.bf16.msra.mxu0 0
        %810 = vmatprep.subr.bf16.mxu0 0
        %811 = vmatpush1.bf16.msra.mxu0 0
        %812 = vmatprep.subr.bf16.mxu0 0
        %813 = vmatpush1.bf16.msra.mxu0 0
        %814 = vmatprep.subr.bf16.mxu0 0
        %815 = vmatpush1.bf16.msra.mxu0 0
        %816 = vmatprep.subr.bf16.mxu0 0
        %817 = vmatpush1.bf16.msra.mxu0 0
        %818 = vmatprep.subr.bf16.mxu0 0
        %819 = vmatpush1.bf16.msra.mxu0 0
        %820 = vmatprep.subr.bf16.mxu0 0
        %821 = vmatpush1.bf16.msra.mxu0 0
        %822 = vmatprep.subr.bf16.mxu0 0
        %823 = vmatpush1.bf16.msra.mxu0 0
        %824 = vmatprep.subr.bf16.mxu0 0
        %825 = vmatpush1.bf16.msra.mxu0 0
        %826 = vmatprep.subr.bf16.mxu0 0
        %827 = vmatpush1.bf16.msra.mxu0 0
        %828 = vmatprep.mubr.bf16.mxu0 0
        %829 = vmatmul.mubr.bf16.gmra.mrb[0].mxu0 %v794
        %v830 = vpop.f32.mrb[0].mxu0
        %v831 = vadd.f32 0.0, %v830
        %v832 = vpop.f32.mrb[0].mxu0
        %v833 = vpop.f32.mrb[0].mxu0
        %v834 = vadd.f32 0.0, %v833
        %v835 = vpop.f32.mrb[0].mxu0
        %836 = vdwg.mxu0
        %v837 = vlaneseq
        %v838 = vshrl.u32 %v837, 7
        %v839 = vsub.s32 2, %v838
        %v840 = vrot.slane %v573, %v839
        %v841 = vmul.f32 %v831, %v840
        %v842 = vmul.f32 %v834, %v840
        %v843 = vlaneseq
        %v844 = vshrl.u32 %v843, 7
        %v845 = vsub.s32 3, %v844
        %v846 = vrot.slane %v573, %v845
        %v847 = vadd.f32 %v841, %v846
        %v848 = vadd.f32 %v842, %v846
        %v849 = vmax.f32 %v847, 0.0
        %v850 = vmax.f32 %v848, 0.0
        %v851 = vld [vmem:[%s5] sm:$0x1]
        %v853 = vlaneseq
        %v854 = vshrl.u32 %v853, 7
        %v855 = vsub.s32 0, %v854
        %v856 = vrot.slane %v851, %v855
        %v858 = vmul.f32 %v849, %v856
        %v859 = vmul.f32 %v850, %v856
        %v860 = vsel %vm792, %v858, 0.0
        %861 = vadd.xlane.f32.xlu0 %v860
        %v862 = vpop.xlane.xlu0 %861
        %v863 = vsel %vm792, %v859, 0.0
        %864 = vadd.xlane.f32.xlu0 %v863
        %v865 = vpop.xlane.xlu0 %864
        %v867 = vlaneseq
        %v868 = vshrl.u32 %v867, 7
        %v869 = vsub.s32 0, %v868
        %v870 = vrot.slane %v576, %v869
        %v872 = vadd.f32 %v862, %v870
        %v873 = vadd.f32 %v865, %v870
        %876 = vrot.lane.b32.xlu0 %v872, 61
        %v877 = vpop.permute.xlu0 %876
        %878 = vrot.lane.b32.xlu0 %v873, 61
        %v879 = vpop.permute.xlu0 %878
        %vm882 = vcmask 7168
        %883 = vst.msk [vmem:[%s566] sm:$0xff] %vm882, %v877
        %884 = vst.msk [vmem:[%s566 + $0x8] sm:$0xff] %vm882, %v879
        %v885 = vxor.u32 %v872, 2147483648
        %v886 = vxor.u32 %v873, 2147483648
        %v887 = vmul.f32 %v885, 1.442695
        %v888 = vpow.pop %v887
        %v889 = vmul.f32 %v886, 1.442695
        %v890 = vpow.pop %v889
        %v891 = vadd.f32 %v888, 1.0
        %v892 = vadd.f32 %v890, 1.0
        %v893 = vrcp.pop %v891
        %v894 = vmul.f32 1.0, %v893
        %v895 = vrcp.pop %v892
        %v896 = vmul.f32 1.0, %v895
        %898 = vset.pattern.permute.xlu0 67
        %899 = vperm.xlu0 %898, %v894
        %v900 = vpop.permute.xlu0 %899
        %903 = vset.pattern.permute.xlu0 67
        %904 = vperm.xlu0 %903, %v896
        %v905 = vpop.permute.xlu0 %904
        %v907 = vmul.f32 %v849, %v900
        %v908 = vmul.f32 %v850, %v905
        %v909 = vpack.c.bf16 %v908, %v907
        %v911 = vsel %vm588, %v572, 0
        %913 = vmatprep.subr.bf16.mxu0 0
        %914 = vmatpush1.bf16.msra.mxu0 %v909
        %915 = vmatprep.subr.bf16.mxu0 0
        %916 = vmatpush1.bf16.msra.mxu0 0
        %917 = vmatprep.subr.bf16.mxu0 0
        %918 = vmatpush1.bf16.msra.mxu0 0
        %919 = vmatprep.subr.bf16.mxu0 0
        %920 = vmatpush1.bf16.msra.mxu0 0
        %921 = vmatprep.subr.bf16.mxu0 0
        %922 = vmatpush1.bf16.msra.mxu0 0
        %923 = vmatprep.subr.bf16.mxu0 0
        %924 = vmatpush1.bf16.msra.mxu0 0
        %925 = vmatprep.subr.bf16.mxu0 0
        %926 = vmatpush1.bf16.msra.mxu0 0
        %927 = vmatprep.subr.bf16.mxu0 0
        %928 = vmatpush1.bf16.msra.mxu0 0
        %929 = vmatprep.subr.bf16.mxu0 0
        %930 = vmatpush1.bf16.msra.mxu0 0
        %931 = vmatprep.subr.bf16.mxu0 0
        %932 = vmatpush1.bf16.msra.mxu0 0
        %933 = vmatprep.subr.bf16.mxu0 0
        %934 = vmatpush1.bf16.msra.mxu0 0
        %935 = vmatprep.subr.bf16.mxu0 0
        %936 = vmatpush1.bf16.msra.mxu0 0
        %937 = vmatprep.subr.bf16.mxu0 0
        %938 = vmatpush1.bf16.msra.mxu0 0
        %939 = vmatprep.subr.bf16.mxu0 0
        %940 = vmatpush1.bf16.msra.mxu0 0
        %941 = vmatprep.subr.bf16.mxu0 0
        %942 = vmatpush1.bf16.msra.mxu0 0
        %943 = vmatprep.subr.bf16.mxu0 0
        %944 = vmatpush1.bf16.msra.mxu0 0
        %945 = vmatprep.mubr.bf16.mxu0 0
        %946 = vmatmul.mubr.bf16.gmra.mrb[0].mxu0 %v911
        %v947 = vpop.f32.mrb[0].mxu0
        %v948 = vadd.f32 0.0, %v947
        %v949 = vpop.f32.mrb[0].mxu0
        %v950 = vpop.f32.mrb[0].mxu0
        %v951 = vpop.f32.mrb[0].mxu0
        %952 = vdwg.mxu0
        %v953 = vpack.c.bf16 %v948, %v948
        %v954 = vld [vmem:[%s6] sm:$0xff]
        %v955 = vld [vmem:[%s6 + $0x8] sm:$0xff]
        %v956 = vld [vmem:[%s6 + $0x10] sm:$0xff]
        %v957 = vld [vmem:[%s6 + $0x18] sm:$0xff]
        %v958 = vld [vmem:[%s6 + $0x20] sm:$0xff]
        %v959 = vld [vmem:[%s6 + $0x28] sm:$0xff]
        %v960 = vld [vmem:[%s6 + $0x30] sm:$0xff]
        %v961 = vld [vmem:[%s6 + $0x38] sm:$0xff]
        %v970 = vunpack.c.l.b16 %v954
        %v971 = vunpack.c.h.b16 %v954
        %v972 = vunpack.c.l.b16 %v955
        %v973 = vunpack.c.h.b16 %v955
        %v974 = vunpack.c.l.b16 %v956
        %v975 = vunpack.c.h.b16 %v956
        %v976 = vunpack.c.l.b16 %v957
        %v977 = vunpack.c.h.b16 %v957
        %v978 = vunpack.c.l.b16 %v958
        %v979 = vunpack.c.h.b16 %v958
        %v980 = vunpack.c.l.b16 %v959
        %v981 = vunpack.c.h.b16 %v959
        %v982 = vunpack.c.l.b16 %v960
        %v983 = vunpack.c.h.b16 %v960
        %v984 = vunpack.c.l.b16 %v961
        %v985 = vunpack.c.h.b16 %v961
        %v986 = vpack.c.b16 %v972, %v970
        %v987 = vpack.c.b16 %v973, %v971
        %v988 = vpack.c.b16 %v976, %v974
        %v989 = vpack.c.b16 %v977, %v975
        %v990 = vpack.c.b16 %v980, %v978
        %v991 = vpack.c.b16 %v981, %v979
        %v992 = vpack.c.b16 %v984, %v982
        %v993 = vpack.c.b16 %v985, %v983
        %v1003 = vsel %vm792, %v953, 0
        %1005 = vmatprep.subr.bf16.mxu0 %v987
        %1006 = vmatpush1.bf16.msra.mxu0 %v986
        %1007 = vmatprep.subr.bf16.mxu0 %v989
        %1008 = vmatpush1.bf16.msra.mxu0 %v988
        %1009 = vmatprep.subr.bf16.mxu0 %v991
        %1010 = vmatpush1.bf16.msra.mxu0 %v990
        %1011 = vmatprep.subr.bf16.mxu0 %v993
        %1012 = vmatpush1.bf16.msra.mxu0 %v992
        %1013 = vmatprep.subr.bf16.mxu0 0
        %1014 = vmatpush1.bf16.msra.mxu0 0
        %1015 = vmatprep.subr.bf16.mxu0 0
        %1016 = vmatpush1.bf16.msra.mxu0 0
        %1017 = vmatprep.subr.bf16.mxu0 0
        %1018 = vmatpush1.bf16.msra.mxu0 0
        %1019 = vmatprep.subr.bf16.mxu0 0
        %1020 = vmatpush1.bf16.msra.mxu0 0
        %1021 = vmatprep.subr.bf16.mxu0 0
        %1022 = vmatpush1.bf16.msra.mxu0 0
        %1023 = vmatprep.subr.bf16.mxu0 0
        %1024 = vmatpush1.bf16.msra.mxu0 0
        %1025 = vmatprep.subr.bf16.mxu0 0
        %1026 = vmatpush1.bf16.msra.mxu0 0
        %1027 = vmatprep.subr.bf16.mxu0 0
        %1028 = vmatpush1.bf16.msra.mxu0 0
        %1029 = vmatprep.subr.bf16.mxu0 0
        %1030 = vmatpush1.bf16.msra.mxu0 0
        %1031 = vmatprep.subr.bf16.mxu0 0
        %1032 = vmatpush1.bf16.msra.mxu0 0
        %1033 = vmatprep.subr.bf16.mxu0 0
        %1034 = vmatpush1.bf16.msra.mxu0 0
        %1035 = vmatprep.subr.bf16.mxu0 0
        %1036 = vmatpush1.bf16.msra.mxu0 0
        %1037 = vmatprep.mubr.bf16.mxu0 0
        %1038 = vmatmul.mubr.bf16.gmra.mrb[0].mxu0 %v1003
        %v1039 = vpop.f32.mrb[0].mxu0
        %v1040 = vadd.f32 0.0, %v1039
        %v1041 = vpop.f32.mrb[0].mxu0
        %v1042 = vadd.f32 0.0, %v1041
        %v1043 = vpop.f32.mrb[0].mxu0
        %v1044 = vpop.f32.mrb[0].mxu0
        %1045 = vdwg.mxu0
        %v1047 = vlaneseq
        %v1048 = vshrl.u32 %v1047, 7
        %v1049 = vsub.s32 0, %v1048
        %v1050 = vrot.slane %v574, %v1049
        %v1051 = vlaneseq
        %v1052 = vshrl.u32 %v1051, 7
        %v1053 = vsub.s32 2, %v1052
        %v1054 = vrot.slane %v574, %v1053
        %v1057 = vlaneseq
        %v1058 = vshrl.u32 %v1057, 7
        %v1059 = vsub.s32 0, %v1058
        %v1060 = vrot.slane %v1050, %v1059
        %v1061 = vlaneseq
        %v1062 = vshrl.u32 %v1061, 7
        %v1063 = vsub.s32 0, %v1062
        %v1064 = vrot.slane %v1054, %v1063
        %v1065 = vmul.f32 %v1040, %v1060
        %v1066 = vmul.f32 %v1042, %v1064
        %v1067 = vlaneseq
        %v1068 = vshrl.u32 %v1067, 7
        %v1069 = vsub.s32 1, %v1068
        %v1070 = vrot.slane %v574, %v1069
        %v1071 = vlaneseq
        %v1072 = vshrl.u32 %v1071, 7
        %v1073 = vsub.s32 3, %v1072
        %v1074 = vrot.slane %v574, %v1073
        %v1077 = vlaneseq
        %v1078 = vshrl.u32 %v1077, 7
        %v1079 = vsub.s32 1, %v1078
        %v1080 = vrot.slane %v1070, %v1079
        %v1081 = vlaneseq
        %v1082 = vshrl.u32 %v1081, 7
        %v1083 = vsub.s32 1, %v1082
        %v1084 = vrot.slane %v1074, %v1083
        %v1085 = vadd.f32 %v1065, %v1080
        %v1086 = vadd.f32 %v1066, %v1084
        %v1087 = vmax.f32 %v1085, 0.0
        %v1088 = vmax.f32 %v1086, 0.0
        %v1089 = vpack.c.bf16 %v1087, %v1087
        %v1090 = vpack.c.bf16 %v1088, %v1088
        %v1091 = vld [vmem:[%s7] sm:$0xf]
        %v1092 = vld [vmem:[%s7 + $0x4] sm:$0xf]
        %v1093 = vld [vmem:[%s7 + $0x8] sm:$0xf]
        %v1094 = vld [vmem:[%s7 + $0xc] sm:$0xf]
        %v1095 = vld [vmem:[%s7 + $0x10] sm:$0xf]
        %v1096 = vld [vmem:[%s7 + $0x14] sm:$0xf]
        %v1097 = vld [vmem:[%s7 + $0x18] sm:$0xf]
        %v1098 = vld [vmem:[%s7 + $0x1c] sm:$0xf]
        %v1099 = vld [vmem:[%s7 + $0x20] sm:$0xf]
        %v1100 = vld [vmem:[%s7 + $0x24] sm:$0xf]
        %v1101 = vld [vmem:[%s7 + $0x28] sm:$0xf]
        %v1102 = vld [vmem:[%s7 + $0x2c] sm:$0xf]
        %v1103 = vld [vmem:[%s7 + $0x30] sm:$0xf]
        %v1104 = vld [vmem:[%s7 + $0x34] sm:$0xf]
        %v1105 = vld [vmem:[%s7 + $0x38] sm:$0xf]
        %v1106 = vld [vmem:[%s7 + $0x3c] sm:$0xf]
        %v1107 = vld [vmem:[%s7 + $0x40] sm:$0xf]
        %v1108 = vld [vmem:[%s7 + $0x44] sm:$0xf]
        %v1109 = vld [vmem:[%s7 + $0x48] sm:$0x7]
        %v1129 = vunpack.c.l.b16 %v1091
        %v1130 = vunpack.c.l.b16 %v1092
        %v1131 = vunpack.c.l.b16 %v1093
        %v1132 = vunpack.c.l.b16 %v1094
        %v1133 = vunpack.c.l.b16 %v1095
        %v1134 = vunpack.c.l.b16 %v1096
        %v1135 = vunpack.c.l.b16 %v1097
        %v1136 = vunpack.c.l.b16 %v1098
        %v1137 = vunpack.c.l.b16 %v1099
        %v1138 = vunpack.c.l.b16 %v1100
        %v1139 = vunpack.c.l.b16 %v1101
        %v1140 = vunpack.c.l.b16 %v1102
        %v1141 = vunpack.c.l.b16 %v1103
        %v1142 = vunpack.c.l.b16 %v1104
        %v1143 = vunpack.c.l.b16 %v1105
        %v1144 = vunpack.c.l.b16 %v1106
        %v1145 = vunpack.c.l.b16 %v1107
        %v1146 = vunpack.c.l.b16 %v1108
        %v1147 = vunpack.c.l.b16 %v1109
        %v1148 = vpack.c.b16 %v1130, %v1129
        %v1149 = vpack.c.b16 %v1132, %v1131
        %v1150 = vpack.c.b16 %v1134, %v1133
        %v1151 = vpack.c.b16 %v1136, %v1135
        %v1152 = vpack.c.b16 %v1138, %v1137
        %v1153 = vpack.c.b16 %v1140, %v1139
        %v1154 = vpack.c.b16 %v1142, %v1141
        %v1155 = vpack.c.b16 %v1144, %v1143
        %v1156 = vpack.c.b16 %v1146, %v1145
        %v1157 = vpack.c.b16 %v1147, %v1147
        %vm1167 = vcmask 179200
        %v1169 = vsel %vm1167, %v1090, 0
        %v1172 = vsel %vm658, %v1157, 0
        %1174 = vmatprep.subr.bf16.mxu0 0
        %1175 = vmatpush1.bf16.msra.mxu0 %v1148
        %1176 = vmatprep.subr.bf16.mxu0 0
        %1177 = vmatpush1.bf16.msra.mxu0 %v1149
        %1178 = vmatprep.subr.bf16.mxu0 0
        %1179 = vmatpush1.bf16.msra.mxu0 %v1150
        %1180 = vmatprep.subr.bf16.mxu0 0
        %1181 = vmatpush1.bf16.msra.mxu0 %v1151
        %1182 = vmatprep.subr.bf16.mxu0 0
        %1183 = vmatpush1.bf16.msra.mxu0 %v1152
        %1184 = vmatprep.subr.bf16.mxu0 0
        %1185 = vmatpush1.bf16.msra.mxu0 %v1153
        %1186 = vmatprep.subr.bf16.mxu0 0
        %1187 = vmatpush1.bf16.msra.mxu0 %v1154
        %1188 = vmatprep.subr.bf16.mxu0 0
        %1189 = vmatpush1.bf16.msra.mxu0 %v1155
        %1190 = vmatprep.subr.bf16.mxu0 0
        %1191 = vmatpush1.bf16.msra.mxu0 %v1156
        %1192 = vmatprep.subr.bf16.mxu0 0
        %1193 = vmatpush1.bf16.msra.mxu0 %v1172
        %1194 = vmatprep.subr.bf16.mxu0 0
        %1195 = vmatpush1.bf16.msra.mxu0 0
        %1196 = vmatprep.subr.bf16.mxu0 0
        %1197 = vmatpush1.bf16.msra.mxu0 0
        %1198 = vmatprep.subr.bf16.mxu0 0
        %1199 = vmatpush1.bf16.msra.mxu0 0
        %1200 = vmatprep.subr.bf16.mxu0 0
        %1201 = vmatpush1.bf16.msra.mxu0 0
        %1202 = vmatprep.subr.bf16.mxu0 0
        %1203 = vmatpush1.bf16.msra.mxu0 0
        %1204 = vmatprep.subr.bf16.mxu0 0
        %1205 = vmatpush1.bf16.msra.mxu0 0
        %1206 = vmatprep.mubr.bf16.mxu0 %v1169
        %1207 = vmatmul.mubr.bf16.gmra.mrb[0].mxu0 %v1089
        %v1208 = vpop.f32.mrb[0].mxu0
        %v1209 = vadd.f32 0.0, %v1208
        %v1210 = vpop.f32.mrb[0].mxu0
        %v1211 = vpop.f32.mrb[0].mxu0
        %v1212 = vpop.f32.mrb[0].mxu0
        %1213 = vdwg.mxu0
        %v1214 = vlaneseq
        %v1215 = vshrl.u32 %v1214, 7
        %v1216 = vsub.s32 0, %v1215
        %v1217 = vrot.slane %v575, %v1216
        %v1218 = vmul.f32 %v1209, %v1217
        %v1219 = vlaneseq
        %v1220 = vshrl.u32 %v1219, 7
        %v1221 = vsub.s32 1, %v1220
        %v1222 = vrot.slane %v575, %v1221
        %v1223 = vadd.f32 %v1218, %v1222
        %v1224 = vmax.f32 %v1223, 0.0
        %v1225 = vpack.c.bf16 %v1224, %v1224
        %v1226 = vld [vmem:[%s8] sm:$0xf]
        %v1227 = vld [vmem:[%s8 + $0x4] sm:$0xf]
        %v1228 = vld [vmem:[%s8 + $0x8] sm:$0xf]
        %v1229 = vld [vmem:[%s8 + $0xc] sm:$0x7]
        %v1234 = vunpack.c.l.b16 %v1226
        %v1235 = vunpack.c.l.b16 %v1227
        %v1236 = vunpack.c.l.b16 %v1228
        %v1237 = vunpack.c.l.b16 %v1229
        %v1238 = vpack.c.b16 %v1235, %v1234
        %v1239 = vpack.c.b16 %v1237, %v1236
        %vm1241 = vcmask 244736
        %v1243 = vsel %vm1241, %v1225, 0
        %vm1245 = vcmask 1046528
        %v1247 = vsel %vm1245, %v1239, 0
        %1249 = vmatprep.subr.bf16.mxu0 0
        %1250 = vmatpush1.bf16.msra.mxu0 %v1238
        %1251 = vmatprep.subr.bf16.mxu0 0
        %1252 = vmatpush1.bf16.msra.mxu0 %v1247
        %1253 = vmatprep.subr.bf16.mxu0 0
        %1254 = vmatpush1.bf16.msra.mxu0 0
        %1255 = vmatprep.subr.bf16.mxu0 0
        %1256 = vmatpush1.bf16.msra.mxu0 0
        %1257 = vmatprep.subr.bf16.mxu0 0
        %1258 = vmatpush1.bf16.msra.mxu0 0
        %1259 = vmatprep.subr.bf16.mxu0 0
        %1260 = vmatpush1.bf16.msra.mxu0 0
        %1261 = vmatprep.subr.bf16.mxu0 0
        %1262 = vmatpush1.bf16.msra.mxu0 0
        %1263 = vmatprep.subr.bf16.mxu0 0
        %1264 = vmatpush1.bf16.msra.mxu0 0
        %1265 = vmatprep.subr.bf16.mxu0 0
        %1266 = vmatpush1.bf16.msra.mxu0 0
        %1267 = vmatprep.subr.bf16.mxu0 0
        %1268 = vmatpush1.bf16.msra.mxu0 0
        %1269 = vmatprep.subr.bf16.mxu0 0
        %1270 = vmatpush1.bf16.msra.mxu0 0
        %1271 = vmatprep.subr.bf16.mxu0 0
        %1272 = vmatpush1.bf16.msra.mxu0 0
        %1273 = vmatprep.subr.bf16.mxu0 0
        %1274 = vmatpush1.bf16.msra.mxu0 0
        %1275 = vmatprep.subr.bf16.mxu0 0
        %1276 = vmatpush1.bf16.msra.mxu0 0
        %1277 = vmatprep.subr.bf16.mxu0 0
        %1278 = vmatpush1.bf16.msra.mxu0 0
        %1279 = vmatprep.subr.bf16.mxu0 0
        %1280 = vmatpush1.bf16.msra.mxu0 0
        %1281 = vmatprep.mubr.bf16.mxu0 0
        %1282 = vmatmul.mubr.bf16.gmra.mrb[0].mxu0 %v1243
        %v1283 = vpop.f32.mrb[0].mxu0
        %v1284 = vadd.f32 %v870, %v1283
        %v1285 = vpop.f32.mrb[0].mxu0
        %v1286 = vpop.f32.mrb[0].mxu0
        %v1287 = vpop.f32.mrb[0].mxu0
        %1288 = vdwg.mxu0
        %v1289 = vxor.u32 %v1284, 2147483648
        %v1290 = vmul.f32 %v1289, 1.442695
        %v1291 = vpow.pop %v1290
        %v1292 = vadd.f32 %v1291, 1.0
        %v1293 = vrcp.pop %v1292
        %v1294 = vmul.f32 1.0, %v1293
        %vm1295 = vcmask 541696
        %1296 = vst.msk [vmem:[%s549] sm:$0x3] %vm1295, %v1294
        %s1297 = sand.u32 %s331, 1
        %s1298 = scalar_lea.sflag [#allocation4], %s1297
        %s1299 = sand.u32 %s331, 1
        %s1300 = smul.addr %s1299, 2
        %s1301 = scalar_lea.vmem [#allocation8], %s1300
        %p1302 = scmp.lt.s32.totalorder %s35, 2
        %s1303 = scalar_select %p1302, %s35, 2
        %s1304 = smul.addr %s1303, 2
        %s1305 = smul.addr %s1304, 8
        %s1306 = scalar_lea.vmem %s14, %s1305
        // Predicated region
        $region85: #{tpu_custom_call.1} parent=71 // pred_check
          %p1307 = pneg %p341
        $region86: #{tpu_custom_call.1} parent=71 // pred_check_branch
          %1309 = sbr.rel (%p1307) target = $region88
        $region87: #{tpu_custom_call.1} parent=71 // pred_region
          %s1311 = ssub.s32 32, 32
          %1312 = vsyncadd %s1298, %s1311
          %s1313 = smul.addr %s35, 32
          %s1314 = scalar_lea.hbm %s13, %s1313
          %s1316 = sshll.u32 %s1301, 4
          %s1317 = int_to_ptr.vmem [resolvable:$true] %s1316
          %1319 = dma.vmem_to_hbm [thread:$0]  %s1317, 32, %s1314, %s1298
        $region88: #{tpu_custom_call.1} parent=71 // pred_fallthru
          _
        // Predicated region
        $region89: #{tpu_custom_call.1} parent=71 // pred_check
          %p1320 = pneg %p367
        $region90: #{tpu_custom_call.1} parent=71 // pred_check_branch
          %1322 = sbr.rel (%p1320) target = $region92
        $region91: #{tpu_custom_call.1} parent=71 // pred_region
          _
        $region92: #{tpu_custom_call.1} parent=71 // pred_fallthru
          _
      $region72: #{tpu_custom_call.1} parent=5 // pred_fallthru
        _
      %p1323 = scmp.le.s32.totalorder 2, %s30
      // Predicated region
      $region93: #{tpu_custom_call.1} parent=5 // pred_check
        %p1324 = pneg %p1323
      $region94: #{tpu_custom_call.1} parent=5 // pred_check_branch
        %1326 = sbr.rel (%p1324) target = $region96
      $region95: #{tpu_custom_call.1} parent=5 // pred_region
        %s1327 = ssub.s32 %s30, 2
        // Predicated region
        $region97: #{tpu_custom_call.1} parent=95 // pred_check
          %p1328 = pneg %p347
        $region98: #{tpu_custom_call.1} parent=95 // pred_check_branch
          %1330 = sbr.rel (%p1328) target = $region100
        $region99: #{tpu_custom_call.1} parent=95 // pred_region
          %s1331 = sand.u32 %s332, 1
          %s1332 = scalar_lea.sflag [#allocation4], %s1331
          %s1333 = sand.u32 %s332, 1
          %s1334 = smul.addr %s1333, 2
          %s1335 = scalar_lea.vmem [#allocation8], %s1334
          %1336 = dma.done %s1332, 32
        $region100: #{tpu_custom_call.1} parent=95 // pred_fallthru
          _
        // Predicated region
        $region101: #{tpu_custom_call.1} parent=95 // pred_check
          %p1337 = pneg %p373
        $region102: #{tpu_custom_call.1} parent=95 // pred_check_branch
          %1339 = sbr.rel (%p1337) target = $region104
        $region103: #{tpu_custom_call.1} parent=95 // pred_region
          %p1340 = scmp.lt.s32.totalorder %s36, 2
          %s1341 = scalar_select %p1340, %s36, 2
          %s1342 = smul.addr %s1341, 2
          %s1343 = smul.addr %s1342, 8
          %s1344 = scalar_lea.vmem %s14, %s1343
        $region104: #{tpu_custom_call.1} parent=95 // pred_fallthru
          _
      $region96: #{tpu_custom_call.1} parent=5 // pred_fallthru
        _
    $region6: #{tpu_custom_call.1} parent=1 // loop_footer
      %s34 = sadd.s32 1, %s30
    $region7: #{tpu_custom_call.1} parent=1 // loop_footer_branch
      %29 = sbr.rel target = $region3
    $region8: #{tpu_custom_call.1} parent=1 // loop_exit
      _
    %1345 = vsyncpa [#allocation3], 1
    %s1346 = scalar_lea.sflag [#allocation3], 1
    %1347 = vsyncpa %s1346, 1
    %1348 = vsyncpa [#allocation6], 1
    %s1349 = scalar_lea.sflag [#allocation6], 1
    %1350 = vsyncpa %s1349, 1
    %1351 = vsyncpa [#allocation4], 1
    %s1352 = scalar_lea.sflag [#allocation4], 1
    %1353 = vsyncpa %s1352, 1

</llo_original>
